<compile_context>
chip_gen: v7x
topology: tpu7x:2x2x1
jax: 0.10.0
libtpu: 0.0.40
codegen_flags: <defaults>
</compile_context>

<pallas_src>
import functools

import jax
import jax.numpy as jnp
from jax.experimental import pallas as pl

# ----------------------------- synthetic "bert.config" -----------------------------
BATCH = 2
SEQ = 8
HIDDEN = 32
NUM_HEADS = 2
HEAD_DIM = HIDDEN // NUM_HEADS
INTERMEDIATE = 64
NUM_LAYERS = 2
VOCAB = 100
TYPE_VOCAB = 2
MAX_POS = 16
NUM_LABELS = 3
NL_PAD = 128           # lane-dense padded width for the classifier logits / probabilities
LN_EPS = 1e-12


# --------------------------------- fused kernel ------------------------------------
def _bert_fc_kernel(
    emb_ref, mask_ref,
    emb_ln_g_ref, emb_ln_b_ref,
    wqkv_ref, bqkv_ref, wo_ref, bo_ref, ln1_g_ref, ln1_b_ref,
    w1_ref, b1_ref, w2_ref, b2_ref, ln2_g_ref, ln2_b_ref,
    wp_ref, bp_ref, wc_ref, bc_ref,
    out_ref,
    *, num_heads, eps,
):
    f32 = jnp.float32
    bf16 = jnp.bfloat16
    M, H = emb_ref.shape
    B = mask_ref.shape[0]
    S = mask_ref.shape[2]
    L = wqkv_ref.shape[0]
    DH = H // num_heads

    def layer_norm(x, g, b):
        mu = jnp.mean(x, axis=-1, keepdims=True)
        d = x - mu
        var = jnp.mean(d * d, axis=-1, keepdims=True)
        return d * jax.lax.rsqrt(var + eps) * g + b

    def softmax_last(x, approx):
        x = x - jnp.max(x, axis=-1, keepdims=True)
        e = jnp.exp(x)
        s = jnp.sum(e, axis=-1, keepdims=True)
        if approx:
            return e * pl.reciprocal(s, approx=True)   # EUP slot -> essentially free
        return e / s

    def gelu_tanh(x):
        # TODO(synk): HF BERT default hidden_act='gelu' is the exact erf GELU; the tanh
        # approximation (diff ~1e-3) is used to stay on guaranteed Mosaic elementwise ops.
        return 0.5 * x * (1.0 + jnp.tanh(0.7978845608028654 * (x + 0.044715 * x * x * x)))

    # ---- embeddings: already summed in the wrapper; only the LayerNorm runs here ----
    h = layer_norm(emb_ref[...].astype(f32), emb_ln_g_ref[...], emb_ln_b_ref[...])   # [M, H]

    # Hoisted mask broadcast: built once, reused by every head of every layer.
    mask_b = jnp.broadcast_to(mask_ref[...].astype(f32), (B, S, S))                  # [B, S, S]

    # TODO(synk): at real BERT dims, stream the stacked [L, ...] weights via a grid axis
    # ('arbitrary') with a BlockSpec index_map, tile M with a 'parallel' axis (v7x: 2 TCs,
    # 64 MiB VMEM), and switch this static unroll to lax.fori_loop once L >= ~12.
    for l in range(L):
        h_bf = h.astype(bf16)

        # Fused QKV projection; the 1/sqrt(DH) score scale is pre-folded into the Q
        # columns of wqkv/bqkv, so no scaling of the [B,S,S] score tensor is needed.
        qkv = jnp.dot(h_bf, wqkv_ref[l], preferred_element_type=f32) + bqkv_ref[l]   # [M, 3H]

        attn = bo_ref[l]                                                             # [1, H] bias
        for hd in range(num_heads):
            q = qkv[:, hd * DH:(hd + 1) * DH].reshape(B, S, DH)
            k = qkv[:, H + hd * DH:H + (hd + 1) * DH].reshape(B, S, DH)
            v = qkv[:, 2 * H + hd * DH:2 * H + (hd + 1) * DH].reshape(B, S, DH)
            # contract on the last dim -> no transposed K copy materialized
            s = jnp.einsum("bqd,bkd->bqk", q.astype(bf16), k.astype(bf16),
                           preferred_element_type=f32)                              # [B, S, S]
            p = softmax_last(s + mask_b, approx=True)
            ctx = jnp.einsum("bqk,bkd->bqd", p.astype(bf16), v.astype(bf16),
                             preferred_element_type=f32)                            # [B, S, DH]
            # accumulate the per-head output projection -> no lane-axis concatenate
            attn = attn + jnp.dot(ctx.reshape(M, DH).astype(bf16), wo_ref[l, hd],
                                  preferred_element_type=f32)                        # [M, H]

        h = layer_norm(attn + h, ln1_g_ref[l], ln1_b_ref[l])                         # residual + LN

        h_bf = h.astype(bf16)
        ff = jnp.dot(h_bf, w1_ref[l], preferred_element_type=f32) + b1_ref[l]        # [M, I]
        ff = gelu_tanh(ff)
        ff = jnp.dot(ff.astype(bf16), w2_ref[l], preferred_element_type=f32) + b2_ref[l]
        h = layer_norm(ff + h, ln2_g_ref[l], ln2_b_ref[l])                           # residual + LN

    # ---- pooler: static CLS-row gather (no one-hot selection matmul) ----
    cls = h.reshape(B, S, H)[:, 0, :]                                                # [B, H]
    pooled = jnp.tanh(jnp.dot(cls.astype(bf16), wp_ref[...],
                              preferred_element_type=f32) + bp_ref[...])

    # dropout(hidden_dropout_prob) is identity in eval/inference mode -> no-op.
    # Classifier into a lane-dense 128-wide padded slab; padded lanes carry a -1e30 bias so
    # the exact softmax sends them to exactly 0.
    logits_pad = jnp.dot(pooled.astype(bf16), wc_ref[...],
                         preferred_element_type=f32) + bc_ref[...]                   # [B, 128]
    prob_pad = softmax_last(logits_pad, approx=False)

    out_ref[0] = logits_pad
    out_ref[1] = prob_pad


# ------------------------------ parameter initialization ---------------------------
def init_params(key):
    std = 0.02
    keys = iter(jax.random.split(key, 64))

    def nrm(shape):
        return (std * jax.random.normal(next(keys), shape)).astype(jnp.float32)

    L, H, I, NL = NUM_LAYERS, HIDDEN, INTERMEDIATE, NUM_LABELS
    return {
        "word_emb": nrm((VOCAB, H)),
        "pos_emb": nrm((MAX_POS, H)),
        "type_emb": nrm((TYPE_VOCAB, H)),
        "emb_ln_g": jnp.ones((1, H), jnp.float32),
        "emb_ln_b": jnp.zeros((1, H), jnp.float32),
        # per-layer weights stacked along a leading layer axis; QKV fused -> [L, H, 3H]
        "wqkv": nrm((L, H, 3 * H)),
        "bqkv": jnp.zeros((L, 1, 3 * H), jnp.float32),
        "wo": nrm((L, H, H)),
        "bo": jnp.zeros((L, 1, H), jnp.float32),
        "ln1_g": jnp.ones((L, 1, H), jnp.float32),
        "ln1_b": jnp.zeros((L, 1, H), jnp.float32),
        "w1": nrm((L, H, I)),
        "b1": jnp.zeros((L, 1, I), jnp.float32),
        "w2": nrm((L, I, H)),
        "b2": jnp.zeros((L, 1, H), jnp.float32),
        "ln2_g": jnp.ones((L, 1, H), jnp.float32),
        "ln2_b": jnp.zeros((L, 1, H), jnp.float32),
        # pooler + classifier head
        "wp": nrm((H, H)),
        "bp": jnp.zeros((1, H), jnp.float32),
        "wc": nrm((H, NL)),
        "bc": jnp.zeros((1, NL), jnp.float32),
    }


def _prepare_kernel_params(p):
    """Cast matmul weights to bf16, fold the 1/sqrt(DH) attention scale into the Q columns
    of the fused QKV weight/bias, split wo per head, pad the classifier to a lane-dense
    128-wide slab (padding lanes get a -1e30 bias so the softmax zeroes them)."""
    f32, bf16 = jnp.float32, jnp.bfloat16
    scale = 1.0 / (HEAD_DIM ** 0.5)
    col_scale = jnp.concatenate(
        [jnp.full((HIDDEN,), scale, f32), jnp.ones((2 * HIDDEN,), f32)])           # [3H]
    wc_pad = jnp.zeros((HIDDEN, NL_PAD), f32).at[:, :NUM_LABELS].set(p["wc"])
    bc_pad = jnp.full((1, NL_PAD), -1e30, f32).at[:, :NUM_LABELS].set(p["bc"])
    return dict(
        emb_ln_g=p["emb_ln_g"], emb_ln_b=p["emb_ln_b"],
        wqkv=(p["wqkv"] * col_scale).astype(bf16),
        bqkv=p["bqkv"] * col_scale,
        wo=p["wo"].reshape(NUM_LAYERS, NUM_HEADS, HEAD_DIM, HIDDEN).astype(bf16),
        bo=p["bo"],
        ln1_g=p["ln1_g"], ln1_b=p["ln1_b"],
        w1=p["w1"].astype(bf16), b1=p["b1"],
        w2=p["w2"].astype(bf16), b2=p["b2"],
        ln2_g=p["ln2_g"], ln2_b=p["ln2_b"],
        wp=p["wp"].astype(bf16), bp=p["bp"],
        wc=wc_pad.astype(bf16), bc=bc_pad,
    )


# ---------------------------------- forward pass ------------------------------------
def bert_fc_forward(params, input_ids, attention_mask, token_type_ids):
    B, S = input_ids.shape
    M, H = B * S, HIDDEN

    # Embedding-table gathers are glue in plain JAX; the three tables are pre-summed into
    # a single [M, H] kernel operand (one input DMA instead of three).
    emb = (params["word_emb"][input_ids]
           + params["pos_emb"][:S][None, :, :]
           + params["type_emb"][token_type_ids]).reshape(M, H)
    add_mask = ((1.0 - attention_mask.astype(jnp.float32)) * -10000.0).reshape(B, 1, S)

    kp = _prepare_kernel_params(params)

    kernel = functools.partial(_bert_fc_kernel, num_heads=NUM_HEADS, eps=LN_EPS)
    out = pl.pallas_call(
        kernel,
        out_shape=jax.ShapeDtypeStruct((2, B, NL_PAD), jnp.float32),
    )(
        emb, add_mask,
        kp["emb_ln_g"], kp["emb_ln_b"],
        kp["wqkv"], kp["bqkv"], kp["wo"], kp["bo"], kp["ln1_g"], kp["ln1_b"],
        kp["w1"], kp["b1"], kp["w2"], kp["b2"], kp["ln2_g"], kp["ln2_b"],
        kp["wp"], kp["bp"], kp["wc"], kp["bc"],
    )
    logits = out[0, :, :NUM_LABELS]
    prob = out[1, :, :NUM_LABELS]
    return logits, prob


# --------------------------------------- main ---------------------------------------
if __name__ == "__main__":
    key = jax.random.PRNGKey(0)
    k_param, k_ids, k_type = jax.random.split(key, 3)

    params = init_params(k_param)

    input_ids = jax.random.randint(k_ids, (BATCH, SEQ), 0, VOCAB, dtype=jnp.int32)
    attention_mask = jnp.ones((BATCH, SEQ), jnp.int32).at[1, SEQ - 2:].set(0)  # pad 2 tokens of row 1
    token_type_ids = jax.random.randint(k_type, (BATCH, SEQ), 0, TYPE_VOCAB, dtype=jnp.int32)

    fwd = jax.jit(bert_fc_forward)
    logits, prob = fwd(params, input_ids, attention_mask, token_type_ids)
    jax.block_until_ready((logits, prob))

    assert logits.shape == (BATCH, NUM_LABELS)
    assert prob.shape == (BATCH, NUM_LABELS)
    assert bool(jnp.all(jnp.isfinite(logits))) and bool(jnp.all(jnp.isfinite(prob)))
    assert bool(jnp.allclose(jnp.sum(prob, axis=-1), 1.0, atol=1e-5))
    print("KERNEL_OK")
</pallas_src>

<mosaic_0001>
module attributes {stable_mosaic.version = 11 : i64} {
  func.func @_bert_fc_kernel(%arg0: memref<16x32xf32, #tpu.memory_space<vmem>>, %arg1: memref<2x1x8xf32, #tpu.memory_space<vmem>>, %arg2: memref<1x32xf32, #tpu.memory_space<vmem>>, %arg3: memref<1x32xf32, #tpu.memory_space<vmem>>, %arg4: memref<2x32x96xbf16, #tpu.memory_space<vmem>>, %arg5: memref<2x1x96xf32, #tpu.memory_space<vmem>>, %arg6: memref<2x2x16x32xbf16, #tpu.memory_space<vmem>>, %arg7: memref<2x1x32xf32, #tpu.memory_space<vmem>>, %arg8: memref<2x1x32xf32, #tpu.memory_space<vmem>>, %arg9: memref<2x1x32xf32, #tpu.memory_space<vmem>>, %arg10: memref<2x32x64xbf16, #tpu.memory_space<vmem>>, %arg11: memref<2x1x64xf32, #tpu.memory_space<vmem>>, %arg12: memref<2x64x32xbf16, #tpu.memory_space<vmem>>, %arg13: memref<2x1x32xf32, #tpu.memory_space<vmem>>, %arg14: memref<2x1x32xf32, #tpu.memory_space<vmem>>, %arg15: memref<2x1x32xf32, #tpu.memory_space<vmem>>, %arg16: memref<32x32xbf16, #tpu.memory_space<vmem>>, %arg17: memref<1x32xf32, #tpu.memory_space<vmem>>, %arg18: memref<32x128xbf16, #tpu.memory_space<vmem>>, %arg19: memref<1x128xf32, #tpu.memory_space<vmem>>, %arg20: memref<2x2x128xf32, #tpu.memory_space<vmem>>) attributes {dimension_semantics = [], scalar_prefetch = 0 : i64, scratch_operands = 0 : i64, tpu.core_type = #tpu.core_type<tc>} {
    %c0 = arith.constant 0 : index
    %c0_0 = arith.constant 0 : index
    %0 = vector.load %arg0[%c0, %c0_0] : memref<16x32xf32, #tpu.memory_space<vmem>>, vector<16x32xf32>
    %c0_1 = arith.constant 0 : index
    %c0_2 = arith.constant 0 : index
    %1 = vector.load %arg2[%c0_1, %c0_2] : memref<1x32xf32, #tpu.memory_space<vmem>>, vector<1x32xf32>
    %c0_3 = arith.constant 0 : index
    %c0_4 = arith.constant 0 : index
    %2 = vector.load %arg3[%c0_3, %c0_4] : memref<1x32xf32, #tpu.memory_space<vmem>>, vector<1x32xf32>
    %cst = arith.constant dense<0.000000e+00> : vector<16xf32>
    %3 = vector.multi_reduction <add>, %0, %cst [1] : vector<16x32xf32> to vector<16xf32>
    %4 = vector.shape_cast %3 : vector<16xf32> to vector<16x1xf32>
    %cst_5 = arith.constant 3.200000e+01 : f32
    %5 = vector.broadcast %cst_5 : f32 to vector<16x1xf32>
    %6 = arith.divf %4, %5 : vector<16x1xf32>
    %7 = vector.broadcast %6 : vector<16x1xf32> to vector<16x32xf32>
    %8 = arith.subf %0, %7 : vector<16x32xf32>
    %9 = arith.mulf %8, %8 : vector<16x32xf32>
    %cst_6 = arith.constant dense<0.000000e+00> : vector<16xf32>
    %10 = vector.multi_reduction <add>, %9, %cst_6 [1] : vector<16x32xf32> to vector<16xf32>
    %11 = vector.shape_cast %10 : vector<16xf32> to vector<16x1xf32>
    %cst_7 = arith.constant 3.200000e+01 : f32
    %12 = vector.broadcast %cst_7 : f32 to vector<16x1xf32>
    %13 = arith.divf %11, %12 : vector<16x1xf32>
    %cst_8 = arith.constant 9.99999996E-13 : f32
    %14 = vector.broadcast %cst_8 : f32 to vector<16x1xf32>
    %15 = arith.addf %13, %14 : vector<16x1xf32>
    %16 = math.rsqrt %15 : vector<16x1xf32>
    %17 = vector.broadcast %16 : vector<16x1xf32> to vector<16x32xf32>
    %18 = arith.mulf %8, %17 : vector<16x32xf32>
    %19 = vector.broadcast %1 : vector<1x32xf32> to vector<16x32xf32>
    %20 = arith.mulf %18, %19 : vector<16x32xf32>
    %21 = vector.broadcast %2 : vector<1x32xf32> to vector<16x32xf32>
    %22 = arith.addf %20, %21 : vector<16x32xf32>
    %c0_9 = arith.constant 0 : index
    %c0_10 = arith.constant 0 : index
    %c0_11 = arith.constant 0 : index
    %23 = vector.load %arg1[%c0_9, %c0_10, %c0_11] : memref<2x1x8xf32, #tpu.memory_space<vmem>>, vector<2x1x8xf32>
    %24 = vector.shape_cast %23 : vector<2x1x8xf32> to vector<2x1x8xf32>
    %25 = vector.broadcast %24 : vector<2x1x8xf32> to vector<2x8x8xf32>
    %26 = arith.truncf %22 : vector<16x32xf32> to vector<16x32xbf16>
    %c0_12 = arith.constant 0 : index
    %c0_13 = arith.constant 0 : index
    %c0_14 = arith.constant 0 : index
    %27 = vector.load %arg4[%c0_12, %c0_13, %c0_14] : memref<2x32x96xbf16, #tpu.memory_space<vmem>>, vector<1x32x96xbf16>
    %28 = vector.shape_cast %27 : vector<1x32x96xbf16> to vector<32x96xbf16>
    %cst_15 = arith.constant dense<0.000000e+00> : vector<16x96xf32>
    %29 = tpu.matmul %26, %28, %cst_15 {dimension_numbers = #tpu.dot_dimension_numbers<[1], [0], [0], [1], [0, 0, 1, 1], [], []>} : vector<16x32xbf16>, vector<32x96xbf16>, vector<16x96xf32> -> vector<16x96xf32>
    %c0_16 = arith.constant 0 : index
    %c0_17 = arith.constant 0 : index
    %c0_18 = arith.constant 0 : index
    %30 = vector.load %arg5[%c0_16, %c0_17, %c0_18] : memref<2x1x96xf32, #tpu.memory_space<vmem>>, vector<1x1x96xf32>
    %31 = vector.shape_cast %30 : vector<1x1x96xf32> to vector<1x96xf32>
    %32 = vector.broadcast %31 : vector<1x96xf32> to vector<16x96xf32>
    %33 = arith.addf %29, %32 : vector<16x96xf32>
    %c0_19 = arith.constant 0 : index
    %c0_20 = arith.constant 0 : index
    %c0_21 = arith.constant 0 : index
    %34 = vector.load %arg7[%c0_19, %c0_20, %c0_21] : memref<2x1x32xf32, #tpu.memory_space<vmem>>, vector<1x1x32xf32>
    %35 = vector.shape_cast %34 : vector<1x1x32xf32> to vector<1x32xf32>
    %36 = vector.extract_strided_slice %33 {offsets = [0, 0], sizes = [16, 16], strides = [1, 1]} : vector<16x96xf32> to vector<16x16xf32>
    %37 = vector.shape_cast %36 : vector<16x16xf32> to vector<2x8x16xf32>
    %38 = vector.extract_strided_slice %33 {offsets = [0, 32], sizes = [16, 16], strides = [1, 1]} : vector<16x96xf32> to vector<16x16xf32>
    %39 = vector.shape_cast %38 : vector<16x16xf32> to vector<2x8x16xf32>
    %40 = vector.extract_strided_slice %33 {offsets = [0, 64], sizes = [16, 16], strides = [1, 1]} : vector<16x96xf32> to vector<16x16xf32>
    %41 = vector.shape_cast %40 : vector<16x16xf32> to vector<2x8x16xf32>
    %42 = arith.truncf %37 : vector<2x8x16xf32> to vector<2x8x16xbf16>
    %43 = arith.truncf %39 : vector<2x8x16xf32> to vector<2x8x16xbf16>
    "tpu.trace_start"() <{level = 10 : i32, message = "bqd,bkd->bqk"}> : () -> ()
    %cst_22 = arith.constant dense<0.000000e+00> : vector<2x8x8xf32>
    %44 = tpu.matmul %42, %43, %cst_22 {dimension_numbers = #tpu.dot_dimension_numbers<[2], [2], [1], [1], [0, 0, 0, 1, 1, 1], [0], [0]>} : vector<2x8x16xbf16>, vector<2x8x16xbf16>, vector<2x8x8xf32> -> vector<2x8x8xf32>
    "tpu.trace_stop"() : () -> ()
    %45 = arith.addf %44, %25 : vector<2x8x8xf32>
    %cst_23 = arith.constant dense<0xFF800000> : vector<2x8xf32>
    %46 = vector.multi_reduction <maximumf>, %45, %cst_23 [2] : vector<2x8x8xf32> to vector<2x8xf32>
    %47 = vector.shape_cast %46 : vector<2x8xf32> to vector<2x8x1xf32>
    %48 = vector.broadcast %47 : vector<2x8x1xf32> to vector<2x8x8xf32>
    %49 = arith.subf %45, %48 : vector<2x8x8xf32>
    %50 = math.exp %49 : vector<2x8x8xf32>
    %cst_24 = arith.constant dense<0.000000e+00> : vector<2x8xf32>
    %51 = vector.multi_reduction <add>, %50, %cst_24 [2] : vector<2x8x8xf32> to vector<2x8xf32>
    %52 = vector.shape_cast %51 : vector<2x8xf32> to vector<2x8x1xf32>
    %53 = tpu.reciprocal %52 {approx = true} : vector<2x8x1xf32> -> vector<2x8x1xf32>
    %54 = vector.broadcast %53 : vector<2x8x1xf32> to vector<2x8x8xf32>
    %55 = arith.mulf %50, %54 : vector<2x8x8xf32>
    %56 = arith.truncf %55 : vector<2x8x8xf32> to vector<2x8x8xbf16>
    %57 = arith.truncf %41 : vector<2x8x16xf32> to vector<2x8x16xbf16>
    "tpu.trace_start"() <{level = 10 : i32, message = "bqk,bkd->bqd"}> : () -> ()
    %cst_25 = arith.constant dense<0.000000e+00> : vector<2x8x16xf32>
    %58 = tpu.matmul %56, %57, %cst_25 {dimension_numbers = #tpu.dot_dimension_numbers<[2], [1], [1], [2], [0, 0, 0, 1, 1, 2], [0], [0]>} : vector<2x8x8xbf16>, vector<2x8x16xbf16>, vector<2x8x16xf32> -> vector<2x8x16xf32>
    "tpu.trace_stop"() : () -> ()
    %59 = vector.shape_cast %58 : vector<2x8x16xf32> to vector<16x16xf32>
    %60 = arith.truncf %59 : vector<16x16xf32> to vector<16x16xbf16>
    %c0_26 = arith.constant 0 : index
    %c0_27 = arith.constant 0 : index
    %c0_28 = arith.constant 0 : index
    %c0_29 = arith.constant 0 : index
    %61 = vector.load %arg6[%c0_26, %c0_27, %c0_28, %c0_29] : memref<2x2x16x32xbf16, #tpu.memory_space<vmem>>, vector<1x1x16x32xbf16>
    %62 = vector.shape_cast %61 : vector<1x1x16x32xbf16> to vector<16x32xbf16>
    %cst_30 = arith.constant dense<0.000000e+00> : vector<16x32xf32>
    %63 = tpu.matmul %60, %62, %cst_30 {dimension_numbers = #tpu.dot_dimension_numbers<[1], [0], [0], [1], [0, 0, 1, 1], [], []>} : vector<16x16xbf16>, vector<16x32xbf16>, vector<16x32xf32> -> vector<16x32xf32>
    %64 = vector.broadcast %35 : vector<1x32xf32> to vector<16x32xf32>
    %65 = arith.addf %64, %63 : vector<16x32xf32>
    %66 = vector.extract_strided_slice %33 {offsets = [0, 16], sizes = [16, 16], strides = [1, 1]} : vector<16x96xf32> to vector<16x16xf32>
    %67 = vector.shape_cast %66 : vector<16x16xf32> to vector<2x8x16xf32>
    %68 = vector.extract_strided_slice %33 {offsets = [0, 48], sizes = [16, 16], strides = [1, 1]} : vector<16x96xf32> to vector<16x16xf32>
    %69 = vector.shape_cast %68 : vector<16x16xf32> to vector<2x8x16xf32>
    %70 = vector.extract_strided_slice %33 {offsets = [0, 80], sizes = [16, 16], strides = [1, 1]} : vector<16x96xf32> to vector<16x16xf32>
    %71 = vector.shape_cast %70 : vector<16x16xf32> to vector<2x8x16xf32>
    %72 = arith.truncf %67 : vector<2x8x16xf32> to vector<2x8x16xbf16>
    %73 = arith.truncf %69 : vector<2x8x16xf32> to vector<2x8x16xbf16>
    "tpu.trace_start"() <{level = 10 : i32, message = "bqd,bkd->bqk"}> : () -> ()
    %cst_31 = arith.constant dense<0.000000e+00> : vector<2x8x8xf32>
    %74 = tpu.matmul %72, %73, %cst_31 {dimension_numbers = #tpu.dot_dimension_numbers<[2], [2], [1], [1], [0, 0, 0, 1, 1, 1], [0], [0]>} : vector<2x8x16xbf16>, vector<2x8x16xbf16>, vector<2x8x8xf32> -> vector<2x8x8xf32>
    "tpu.trace_stop"() : () -> ()
    %75 = arith.addf %74, %25 : vector<2x8x8xf32>
    %cst_32 = arith.constant dense<0xFF800000> : vector<2x8xf32>
    %76 = vector.multi_reduction <maximumf>, %75, %cst_32 [2] : vector<2x8x8xf32> to vector<2x8xf32>
    %77 = vector.shape_cast %76 : vector<2x8xf32> to vector<2x8x1xf32>
    %78 = vector.broadcast %77 : vector<2x8x1xf32> to vector<2x8x8xf32>
    %79 = arith.subf %75, %78 : vector<2x8x8xf32>
    %80 = math.exp %79 : vector<2x8x8xf32>
    %cst_33 = arith.constant dense<0.000000e+00> : vector<2x8xf32>
    %81 = vector.multi_reduction <add>, %80, %cst_33 [2] : vector<2x8x8xf32> to vector<2x8xf32>
    %82 = vector.shape_cast %81 : vector<2x8xf32> to vector<2x8x1xf32>
    %83 = tpu.reciprocal %82 {approx = true} : vector<2x8x1xf32> -> vector<2x8x1xf32>
    %84 = vector.broadcast %83 : vector<2x8x1xf32> to vector<2x8x8xf32>
    %85 = arith.mulf %80, %84 : vector<2x8x8xf32>
    %86 = arith.truncf %85 : vector<2x8x8xf32> to vector<2x8x8xbf16>
    %87 = arith.truncf %71 : vector<2x8x16xf32> to vector<2x8x16xbf16>
    "tpu.trace_start"() <{level = 10 : i32, message = "bqk,bkd->bqd"}> : () -> ()
    %cst_34 = arith.constant dense<0.000000e+00> : vector<2x8x16xf32>
    %88 = tpu.matmul %86, %87, %cst_34 {dimension_numbers = #tpu.dot_dimension_numbers<[2], [1], [1], [2], [0, 0, 0, 1, 1, 2], [0], [0]>} : vector<2x8x8xbf16>, vector<2x8x16xbf16>, vector<2x8x16xf32> -> vector<2x8x16xf32>
    "tpu.trace_stop"() : () -> ()
    %89 = vector.shape_cast %88 : vector<2x8x16xf32> to vector<16x16xf32>
    %90 = arith.truncf %89 : vector<16x16xf32> to vector<16x16xbf16>
    %c0_35 = arith.constant 0 : index
    %c1 = arith.constant 1 : index
    %c0_36 = arith.constant 0 : index
    %c0_37 = arith.constant 0 : index
    %91 = vector.load %arg6[%c0_35, %c1, %c0_36, %c0_37] : memref<2x2x16x32xbf16, #tpu.memory_space<vmem>>, vector<1x1x16x32xbf16>
    %92 = vector.shape_cast %91 : vector<1x1x16x32xbf16> to vector<16x32xbf16>
    %cst_38 = arith.constant dense<0.000000e+00> : vector<16x32xf32>
    %93 = tpu.matmul %90, %92, %cst_38 {dimension_numbers = #tpu.dot_dimension_numbers<[1], [0], [0], [1], [0, 0, 1, 1], [], []>} : vector<16x16xbf16>, vector<16x32xbf16>, vector<16x32xf32> -> vector<16x32xf32>
    %94 = arith.addf %65, %93 : vector<16x32xf32>
    %95 = arith.addf %94, %22 : vector<16x32xf32>
    %c0_39 = arith.constant 0 : index
    %c0_40 = arith.constant 0 : index
    %c0_41 = arith.constant 0 : index
    %96 = vector.load %arg8[%c0_39, %c0_40, %c0_41] : memref<2x1x32xf32, #tpu.memory_space<vmem>>, vector<1x1x32xf32>
    %97 = vector.shape_cast %96 : vector<1x1x32xf32> to vector<1x32xf32>
    %c0_42 = arith.constant 0 : index
    %c0_43 = arith.constant 0 : index
    %c0_44 = arith.constant 0 : index
    %98 = vector.load %arg9[%c0_42, %c0_43, %c0_44] : memref<2x1x32xf32, #tpu.memory_space<vmem>>, vector<1x1x32xf32>
    %99 = vector.shape_cast %98 : vector<1x1x32xf32> to vector<1x32xf32>
    %cst_45 = arith.constant dense<0.000000e+00> : vector<16xf32>
    %100 = vector.multi_reduction <add>, %95, %cst_45 [1] : vector<16x32xf32> to vector<16xf32>
    %101 = vector.shape_cast %100 : vector<16xf32> to vector<16x1xf32>
    %cst_46 = arith.constant 3.200000e+01 : f32
    %102 = vector.broadcast %cst_46 : f32 to vector<16x1xf32>
    %103 = arith.divf %101, %102 : vector<16x1xf32>
    %104 = vector.broadcast %103 : vector<16x1xf32> to vector<16x32xf32>
    %105 = arith.subf %95, %104 : vector<16x32xf32>
    %106 = arith.mulf %105, %105 : vector<16x32xf32>
    %cst_47 = arith.constant dense<0.000000e+00> : vector<16xf32>
    %107 = vector.multi_reduction <add>, %106, %cst_47 [1] : vector<16x32xf32> to vector<16xf32>
    %108 = vector.shape_cast %107 : vector<16xf32> to vector<16x1xf32>
    %cst_48 = arith.constant 3.200000e+01 : f32
    %109 = vector.broadcast %cst_48 : f32 to vector<16x1xf32>
    %110 = arith.divf %108, %109 : vector<16x1xf32>
    %cst_49 = arith.constant 9.99999996E-13 : f32
    %111 = vector.broadcast %cst_49 : f32 to vector<16x1xf32>
    %112 = arith.addf %110, %111 : vector<16x1xf32>
    %113 = math.rsqrt %112 : vector<16x1xf32>
    %114 = vector.broadcast %113 : vector<16x1xf32> to vector<16x32xf32>
    %115 = arith.mulf %105, %114 : vector<16x32xf32>
    %116 = vector.broadcast %97 : vector<1x32xf32> to vector<16x32xf32>
    %117 = arith.mulf %115, %116 : vector<16x32xf32>
    %118 = vector.broadcast %99 : vector<1x32xf32> to vector<16x32xf32>
    %119 = arith.addf %117, %118 : vector<16x32xf32>
    %120 = arith.truncf %119 : vector<16x32xf32> to vector<16x32xbf16>
    %c0_50 = arith.constant 0 : index
    %c0_51 = arith.constant 0 : index
    %c0_52 = arith.constant 0 : index
    %121 = vector.load %arg10[%c0_50, %c0_51, %c0_52] : memref<2x32x64xbf16, #tpu.memory_space<vmem>>, vector<1x32x64xbf16>
    %122 = vector.shape_cast %121 : vector<1x32x64xbf16> to vector<32x64xbf16>
    %cst_53 = arith.constant dense<0.000000e+00> : vector<16x64xf32>
    %123 = tpu.matmul %120, %122, %cst_53 {dimension_numbers = #tpu.dot_dimension_numbers<[1], [0], [0], [1], [0, 0, 1, 1], [], []>} : vector<16x32xbf16>, vector<32x64xbf16>, vector<16x64xf32> -> vector<16x64xf32>
    %c0_54 = arith.constant 0 : index
    %c0_55 = arith.constant 0 : index
    %c0_56 = arith.constant 0 : index
    %124 = vector.load %arg11[%c0_54, %c0_55, %c0_56] : memref<2x1x64xf32, #tpu.memory_space<vmem>>, vector<1x1x64xf32>
    %125 = vector.shape_cast %124 : vector<1x1x64xf32> to vector<1x64xf32>
    %126 = vector.broadcast %125 : vector<1x64xf32> to vector<16x64xf32>
    %127 = arith.addf %123, %126 : vector<16x64xf32>
    %cst_57 = arith.constant 5.000000e-01 : f32
    %128 = vector.broadcast %cst_57 : f32 to vector<16x64xf32>
    %129 = arith.mulf %128, %127 : vector<16x64xf32>
    %cst_58 = arith.constant 4.471500e-02 : f32
    %130 = vector.broadcast %cst_58 : f32 to vector<16x64xf32>
    %131 = arith.mulf %130, %127 : vector<16x64xf32>
    %132 = arith.mulf %131, %127 : vector<16x64xf32>
    %133 = arith.mulf %132, %127 : vector<16x64xf32>
    %134 = arith.addf %127, %133 : vector<16x64xf32>
    %cst_59 = arith.constant 0.797884583 : f32
    %135 = vector.broadcast %cst_59 : f32 to vector<16x64xf32>
    %136 = arith.mulf %135, %134 : vector<16x64xf32>
    %137 = math.tanh %136 : vector<16x64xf32>
    %cst_60 = arith.constant 1.000000e+00 : f32
    %138 = vector.broadcast %cst_60 : f32 to vector<16x64xf32>
    %139 = arith.addf %138, %137 : vector<16x64xf32>
    %140 = arith.mulf %129, %139 : vector<16x64xf32>
    %141 = arith.truncf %140 : vector<16x64xf32> to vector<16x64xbf16>
    %c0_61 = arith.constant 0 : index
    %c0_62 = arith.constant 0 : index
    %c0_63 = arith.constant 0 : index
    %142 = vector.load %arg12[%c0_61, %c0_62, %c0_63] : memref<2x64x32xbf16, #tpu.memory_space<vmem>>, vector<1x64x32xbf16>
    %143 = vector.shape_cast %142 : vector<1x64x32xbf16> to vector<64x32xbf16>
    %cst_64 = arith.constant dense<0.000000e+00> : vector<16x32xf32>
    %144 = tpu.matmul %141, %143, %cst_64 {dimension_numbers = #tpu.dot_dimension_numbers<[1], [0], [0], [1], [0, 0, 1, 1], [], []>} : vector<16x64xbf16>, vector<64x32xbf16>, vector<16x32xf32> -> vector<16x32xf32>
    %c0_65 = arith.constant 0 : index
    %c0_66 = arith.constant 0 : index
    %c0_67 = arith.constant 0 : index
    %145 = vector.load %arg13[%c0_65, %c0_66, %c0_67] : memref<2x1x32xf32, #tpu.memory_space<vmem>>, vector<1x1x32xf32>
    %146 = vector.shape_cast %145 : vector<1x1x32xf32> to vector<1x32xf32>
    %147 = vector.broadcast %146 : vector<1x32xf32> to vector<16x32xf32>
    %148 = arith.addf %144, %147 : vector<16x32xf32>
    %149 = arith.addf %148, %119 : vector<16x32xf32>
    %c0_68 = arith.constant 0 : index
    %c0_69 = arith.constant 0 : index
    %c0_70 = arith.constant 0 : index
    %150 = vector.load %arg14[%c0_68, %c0_69, %c0_70] : memref<2x1x32xf32, #tpu.memory_space<vmem>>, vector<1x1x32xf32>
    %151 = vector.shape_cast %150 : vector<1x1x32xf32> to vector<1x32xf32>
    %c0_71 = arith.constant 0 : index
    %c0_72 = arith.constant 0 : index
    %c0_73 = arith.constant 0 : index
    %152 = vector.load %arg15[%c0_71, %c0_72, %c0_73] : memref<2x1x32xf32, #tpu.memory_space<vmem>>, vector<1x1x32xf32>
    %153 = vector.shape_cast %152 : vector<1x1x32xf32> to vector<1x32xf32>
    %cst_74 = arith.constant dense<0.000000e+00> : vector<16xf32>
    %154 = vector.multi_reduction <add>, %149, %cst_74 [1] : vector<16x32xf32> to vector<16xf32>
    %155 = vector.shape_cast %154 : vector<16xf32> to vector<16x1xf32>
    %cst_75 = arith.constant 3.200000e+01 : f32
    %156 = vector.broadcast %cst_75 : f32 to vector<16x1xf32>
    %157 = arith.divf %155, %156 : vector<16x1xf32>
    %158 = vector.broadcast %157 : vector<16x1xf32> to vector<16x32xf32>
    %159 = arith.subf %149, %158 : vector<16x32xf32>
    %160 = arith.mulf %159, %159 : vector<16x32xf32>
    %cst_76 = arith.constant dense<0.000000e+00> : vector<16xf32>
    %161 = vector.multi_reduction <add>, %160, %cst_76 [1] : vector<16x32xf32> to vector<16xf32>
    %162 = vector.shape_cast %161 : vector<16xf32> to vector<16x1xf32>
    %cst_77 = arith.constant 3.200000e+01 : f32
    %163 = vector.broadcast %cst_77 : f32 to vector<16x1xf32>
    %164 = arith.divf %162, %163 : vector<16x1xf32>
    %cst_78 = arith.constant 9.99999996E-13 : f32
    %165 = vector.broadcast %cst_78 : f32 to vector<16x1xf32>
    %166 = arith.addf %164, %165 : vector<16x1xf32>
    %167 = math.rsqrt %166 : vector<16x1xf32>
    %168 = vector.broadcast %167 : vector<16x1xf32> to vector<16x32xf32>
    %169 = arith.mulf %159, %168 : vector<16x32xf32>
    %170 = vector.broadcast %151 : vector<1x32xf32> to vector<16x32xf32>
    %171 = arith.mulf %169, %170 : vector<16x32xf32>
    %172 = vector.broadcast %153 : vector<1x32xf32> to vector<16x32xf32>
    %173 = arith.addf %171, %172 : vector<16x32xf32>
    %174 = arith.truncf %173 : vector<16x32xf32> to vector<16x32xbf16>
    %c1_79 = arith.constant 1 : index
    %c0_80 = arith.constant 0 : index
    %c0_81 = arith.constant 0 : index
    %175 = vector.load %arg4[%c1_79, %c0_80, %c0_81] : memref<2x32x96xbf16, #tpu.memory_space<vmem>>, vector<1x32x96xbf16>
    %176 = vector.shape_cast %175 : vector<1x32x96xbf16> to vector<32x96xbf16>
    %cst_82 = arith.constant dense<0.000000e+00> : vector<16x96xf32>
    %177 = tpu.matmul %174, %176, %cst_82 {dimension_numbers = #tpu.dot_dimension_numbers<[1], [0], [0], [1], [0, 0, 1, 1], [], []>} : vector<16x32xbf16>, vector<32x96xbf16>, vector<16x96xf32> -> vector<16x96xf32>
    %c1_83 = arith.constant 1 : index
    %c0_84 = arith.constant 0 : index
    %c0_85 = arith.constant 0 : index
    %178 = vector.load %arg5[%c1_83, %c0_84, %c0_85] : memref<2x1x96xf32, #tpu.memory_space<vmem>>, vector<1x1x96xf32>
    %179 = vector.shape_cast %178 : vector<1x1x96xf32> to vector<1x96xf32>
    %180 = vector.broadcast %179 : vector<1x96xf32> to vector<16x96xf32>
    %181 = arith.addf %177, %180 : vector<16x96xf32>
    %c1_86 = arith.constant 1 : index
    %c0_87 = arith.constant 0 : index
    %c0_88 = arith.constant 0 : index
    %182 = vector.load %arg7[%c1_86, %c0_87, %c0_88] : memref<2x1x32xf32, #tpu.memory_space<vmem>>, vector<1x1x32xf32>
    %183 = vector.shape_cast %182 : vector<1x1x32xf32> to vector<1x32xf32>
    %184 = vector.extract_strided_slice %181 {offsets = [0, 0], sizes = [16, 16], strides = [1, 1]} : vector<16x96xf32> to vector<16x16xf32>
    %185 = vector.shape_cast %184 : vector<16x16xf32> to vector<2x8x16xf32>
    %186 = vector.extract_strided_slice %181 {offsets = [0, 32], sizes = [16, 16], strides = [1, 1]} : vector<16x96xf32> to vector<16x16xf32>
    %187 = vector.shape_cast %186 : vector<16x16xf32> to vector<2x8x16xf32>
    %188 = vector.extract_strided_slice %181 {offsets = [0, 64], sizes = [16, 16], strides = [1, 1]} : vector<16x96xf32> to vector<16x16xf32>
    %189 = vector.shape_cast %188 : vector<16x16xf32> to vector<2x8x16xf32>
    %190 = arith.truncf %185 : vector<2x8x16xf32> to vector<2x8x16xbf16>
    %191 = arith.truncf %187 : vector<2x8x16xf32> to vector<2x8x16xbf16>
    "tpu.trace_start"() <{level = 10 : i32, message = "bqd,bkd->bqk"}> : () -> ()
    %cst_89 = arith.constant dense<0.000000e+00> : vector<2x8x8xf32>
    %192 = tpu.matmul %190, %191, %cst_89 {dimension_numbers = #tpu.dot_dimension_numbers<[2], [2], [1], [1], [0, 0, 0, 1, 1, 1], [0], [0]>} : vector<2x8x16xbf16>, vector<2x8x16xbf16>, vector<2x8x8xf32> -> vector<2x8x8xf32>
    "tpu.trace_stop"() : () -> ()
    %193 = arith.addf %192, %25 : vector<2x8x8xf32>
    %cst_90 = arith.constant dense<0xFF800000> : vector<2x8xf32>
    %194 = vector.multi_reduction <maximumf>, %193, %cst_90 [2] : vector<2x8x8xf32> to vector<2x8xf32>
    %195 = vector.shape_cast %194 : vector<2x8xf32> to vector<2x8x1xf32>
    %196 = vector.broadcast %195 : vector<2x8x1xf32> to vector<2x8x8xf32>
    %197 = arith.subf %193, %196 : vector<2x8x8xf32>
    %198 = math.exp %197 : vector<2x8x8xf32>
    %cst_91 = arith.constant dense<0.000000e+00> : vector<2x8xf32>
    %199 = vector.multi_reduction <add>, %198, %cst_91 [2] : vector<2x8x8xf32> to vector<2x8xf32>
    %200 = vector.shape_cast %199 : vector<2x8xf32> to vector<2x8x1xf32>
    %201 = tpu.reciprocal %200 {approx = true} : vector<2x8x1xf32> -> vector<2x8x1xf32>
    %202 = vector.broadcast %201 : vector<2x8x1xf32> to vector<2x8x8xf32>
    %203 = arith.mulf %198, %202 : vector<2x8x8xf32>
    %204 = arith.truncf %203 : vector<2x8x8xf32> to vector<2x8x8xbf16>
    %205 = arith.truncf %189 : vector<2x8x16xf32> to vector<2x8x16xbf16>
    "tpu.trace_start"() <{level = 10 : i32, message = "bqk,bkd->bqd"}> : () -> ()
    %cst_92 = arith.constant dense<0.000000e+00> : vector<2x8x16xf32>
    %206 = tpu.matmul %204, %205, %cst_92 {dimension_numbers = #tpu.dot_dimension_numbers<[2], [1], [1], [2], [0, 0, 0, 1, 1, 2], [0], [0]>} : vector<2x8x8xbf16>, vector<2x8x16xbf16>, vector<2x8x16xf32> -> vector<2x8x16xf32>
    "tpu.trace_stop"() : () -> ()
    %207 = vector.shape_cast %206 : vector<2x8x16xf32> to vector<16x16xf32>
    %208 = arith.truncf %207 : vector<16x16xf32> to vector<16x16xbf16>
    %c1_93 = arith.constant 1 : index
    %c0_94 = arith.constant 0 : index
    %c0_95 = arith.constant 0 : index
    %c0_96 = arith.constant 0 : index
    %209 = vector.load %arg6[%c1_93, %c0_94, %c0_95, %c0_96] : memref<2x2x16x32xbf16, #tpu.memory_space<vmem>>, vector<1x1x16x32xbf16>
    %210 = vector.shape_cast %209 : vector<1x1x16x32xbf16> to vector<16x32xbf16>
    %cst_97 = arith.constant dense<0.000000e+00> : vector<16x32xf32>
    %211 = tpu.matmul %208, %210, %cst_97 {dimension_numbers = #tpu.dot_dimension_numbers<[1], [0], [0], [1], [0, 0, 1, 1], [], []>} : vector<16x16xbf16>, vector<16x32xbf16>, vector<16x32xf32> -> vector<16x32xf32>
    %212 = vector.broadcast %183 : vector<1x32xf32> to vector<16x32xf32>
    %213 = arith.addf %212, %211 : vector<16x32xf32>
    %214 = vector.extract_strided_slice %181 {offsets = [0, 16], sizes = [16, 16], strides = [1, 1]} : vector<16x96xf32> to vector<16x16xf32>
    %215 = vector.shape_cast %214 : vector<16x16xf32> to vector<2x8x16xf32>
    %216 = vector.extract_strided_slice %181 {offsets = [0, 48], sizes = [16, 16], strides = [1, 1]} : vector<16x96xf32> to vector<16x16xf32>
    %217 = vector.shape_cast %216 : vector<16x16xf32> to vector<2x8x16xf32>
    %218 = vector.extract_strided_slice %181 {offsets = [0, 80], sizes = [16, 16], strides = [1, 1]} : vector<16x96xf32> to vector<16x16xf32>
    %219 = vector.shape_cast %218 : vector<16x16xf32> to vector<2x8x16xf32>
    %220 = arith.truncf %215 : vector<2x8x16xf32> to vector<2x8x16xbf16>
    %221 = arith.truncf %217 : vector<2x8x16xf32> to vector<2x8x16xbf16>
    "tpu.trace_start"() <{level = 10 : i32, message = "bqd,bkd->bqk"}> : () -> ()
    %cst_98 = arith.constant dense<0.000000e+00> : vector<2x8x8xf32>
    %222 = tpu.matmul %220, %221, %cst_98 {dimension_numbers = #tpu.dot_dimension_numbers<[2], [2], [1], [1], [0, 0, 0, 1, 1, 1], [0], [0]>} : vector<2x8x16xbf16>, vector<2x8x16xbf16>, vector<2x8x8xf32> -> vector<2x8x8xf32>
    "tpu.trace_stop"() : () -> ()
    %223 = arith.addf %222, %25 : vector<2x8x8xf32>
    %cst_99 = arith.constant dense<0xFF800000> : vector<2x8xf32>
    %224 = vector.multi_reduction <maximumf>, %223, %cst_99 [2] : vector<2x8x8xf32> to vector<2x8xf32>
    %225 = vector.shape_cast %224 : vector<2x8xf32> to vector<2x8x1xf32>
    %226 = vector.broadcast %225 : vector<2x8x1xf32> to vector<2x8x8xf32>
    %227 = arith.subf %223, %226 : vector<2x8x8xf32>
    %228 = math.exp %227 : vector<2x8x8xf32>
    %cst_100 = arith.constant dense<0.000000e+00> : vector<2x8xf32>
    %229 = vector.multi_reduction <add>, %228, %cst_100 [2] : vector<2x8x8xf32> to vector<2x8xf32>
    %230 = vector.shape_cast %229 : vector<2x8xf32> to vector<2x8x1xf32>
    %231 = tpu.reciprocal %230 {approx = true} : vector<2x8x1xf32> -> vector<2x8x1xf32>
    %232 = vector.broadcast %231 : vector<2x8x1xf32> to vector<2x8x8xf32>
    %233 = arith.mulf %228, %232 : vector<2x8x8xf32>
    %234 = arith.truncf %233 : vector<2x8x8xf32> to vector<2x8x8xbf16>
    %235 = arith.truncf %219 : vector<2x8x16xf32> to vector<2x8x16xbf16>
    "tpu.trace_start"() <{level = 10 : i32, message = "bqk,bkd->bqd"}> : () -> ()
    %cst_101 = arith.constant dense<0.000000e+00> : vector<2x8x16xf32>
    %236 = tpu.matmul %234, %235, %cst_101 {dimension_numbers = #tpu.dot_dimension_numbers<[2], [1], [1], [2], [0, 0, 0, 1, 1, 2], [0], [0]>} : vector<2x8x8xbf16>, vector<2x8x16xbf16>, vector<2x8x16xf32> -> vector<2x8x16xf32>
    "tpu.trace_stop"() : () -> ()
    %237 = vector.shape_cast %236 : vector<2x8x16xf32> to vector<16x16xf32>
    %238 = arith.truncf %237 : vector<16x16xf32> to vector<16x16xbf16>
    %c1_102 = arith.constant 1 : index
    %c1_103 = arith.constant 1 : index
    %c0_104 = arith.constant 0 : index
    %c0_105 = arith.constant 0 : index
    %239 = vector.load %arg6[%c1_102, %c1_103, %c0_104, %c0_105] : memref<2x2x16x32xbf16, #tpu.memory_space<vmem>>, vector<1x1x16x32xbf16>
    %240 = vector.shape_cast %239 : vector<1x1x16x32xbf16> to vector<16x32xbf16>
    %cst_106 = arith.constant dense<0.000000e+00> : vector<16x32xf32>
    %241 = tpu.matmul %238, %240, %cst_106 {dimension_numbers = #tpu.dot_dimension_numbers<[1], [0], [0], [1], [0, 0, 1, 1], [], []>} : vector<16x16xbf16>, vector<16x32xbf16>, vector<16x32xf32> -> vector<16x32xf32>
    %242 = arith.addf %213, %241 : vector<16x32xf32>
    %243 = arith.addf %242, %173 : vector<16x32xf32>
    %c1_107 = arith.constant 1 : index
    %c0_108 = arith.constant 0 : index
    %c0_109 = arith.constant 0 : index
    %244 = vector.load %arg8[%c1_107, %c0_108, %c0_109] : memref<2x1x32xf32, #tpu.memory_space<vmem>>, vector<1x1x32xf32>
    %245 = vector.shape_cast %244 : vector<1x1x32xf32> to vector<1x32xf32>
    %c1_110 = arith.constant 1 : index
    %c0_111 = arith.constant 0 : index
    %c0_112 = arith.constant 0 : index
    %246 = vector.load %arg9[%c1_110, %c0_111, %c0_112] : memref<2x1x32xf32, #tpu.memory_space<vmem>>, vector<1x1x32xf32>
    %247 = vector.shape_cast %246 : vector<1x1x32xf32> to vector<1x32xf32>
    %cst_113 = arith.constant dense<0.000000e+00> : vector<16xf32>
    %248 = vector.multi_reduction <add>, %243, %cst_113 [1] : vector<16x32xf32> to vector<16xf32>
    %249 = vector.shape_cast %248 : vector<16xf32> to vector<16x1xf32>
    %cst_114 = arith.constant 3.200000e+01 : f32
    %250 = vector.broadcast %cst_114 : f32 to vector<16x1xf32>
    %251 = arith.divf %249, %250 : vector<16x1xf32>
    %252 = vector.broadcast %251 : vector<16x1xf32> to vector<16x32xf32>
    %253 = arith.subf %243, %252 : vector<16x32xf32>
    %254 = arith.mulf %253, %253 : vector<16x32xf32>
    %cst_115 = arith.constant dense<0.000000e+00> : vector<16xf32>
    %255 = vector.multi_reduction <add>, %254, %cst_115 [1] : vector<16x32xf32> to vector<16xf32>
    %256 = vector.shape_cast %255 : vector<16xf32> to vector<16x1xf32>
    %cst_116 = arith.constant 3.200000e+01 : f32
    %257 = vector.broadcast %cst_116 : f32 to vector<16x1xf32>
    %258 = arith.divf %256, %257 : vector<16x1xf32>
    %cst_117 = arith.constant 9.99999996E-13 : f32
    %259 = vector.broadcast %cst_117 : f32 to vector<16x1xf32>
    %260 = arith.addf %258, %259 : vector<16x1xf32>
    %261 = math.rsqrt %260 : vector<16x1xf32>
    %262 = vector.broadcast %261 : vector<16x1xf32> to vector<16x32xf32>
    %263 = arith.mulf %253, %262 : vector<16x32xf32>
    %264 = vector.broadcast %245 : vector<1x32xf32> to vector<16x32xf32>
    %265 = arith.mulf %263, %264 : vector<16x32xf32>
    %266 = vector.broadcast %247 : vector<1x32xf32> to vector<16x32xf32>
    %267 = arith.addf %265, %266 : vector<16x32xf32>
    %268 = arith.truncf %267 : vector<16x32xf32> to vector<16x32xbf16>
    %c1_118 = arith.constant 1 : index
    %c0_119 = arith.constant 0 : index
    %c0_120 = arith.constant 0 : index
    %269 = vector.load %arg10[%c1_118, %c0_119, %c0_120] : memref<2x32x64xbf16, #tpu.memory_space<vmem>>, vector<1x32x64xbf16>
    %270 = vector.shape_cast %269 : vector<1x32x64xbf16> to vector<32x64xbf16>
    %cst_121 = arith.constant dense<0.000000e+00> : vector<16x64xf32>
    %271 = tpu.matmul %268, %270, %cst_121 {dimension_numbers = #tpu.dot_dimension_numbers<[1], [0], [0], [1], [0, 0, 1, 1], [], []>} : vector<16x32xbf16>, vector<32x64xbf16>, vector<16x64xf32> -> vector<16x64xf32>
    %c1_122 = arith.constant 1 : index
    %c0_123 = arith.constant 0 : index
    %c0_124 = arith.constant 0 : index
    %272 = vector.load %arg11[%c1_122, %c0_123, %c0_124] : memref<2x1x64xf32, #tpu.memory_space<vmem>>, vector<1x1x64xf32>
    %273 = vector.shape_cast %272 : vector<1x1x64xf32> to vector<1x64xf32>
    %274 = vector.broadcast %273 : vector<1x64xf32> to vector<16x64xf32>
    %275 = arith.addf %271, %274 : vector<16x64xf32>
    %cst_125 = arith.constant 5.000000e-01 : f32
    %276 = vector.broadcast %cst_125 : f32 to vector<16x64xf32>
    %277 = arith.mulf %276, %275 : vector<16x64xf32>
    %cst_126 = arith.constant 4.471500e-02 : f32
    %278 = vector.broadcast %cst_126 : f32 to vector<16x64xf32>
    %279 = arith.mulf %278, %275 : vector<16x64xf32>
    %280 = arith.mulf %279, %275 : vector<16x64xf32>
    %281 = arith.mulf %280, %275 : vector<16x64xf32>
    %282 = arith.addf %275, %281 : vector<16x64xf32>
    %cst_127 = arith.constant 0.797884583 : f32
    %283 = vector.broadcast %cst_127 : f32 to vector<16x64xf32>
    %284 = arith.mulf %283, %282 : vector<16x64xf32>
    %285 = math.tanh %284 : vector<16x64xf32>
    %cst_128 = arith.constant 1.000000e+00 : f32
    %286 = vector.broadcast %cst_128 : f32 to vector<16x64xf32>
    %287 = arith.addf %286, %285 : vector<16x64xf32>
    %288 = arith.mulf %277, %287 : vector<16x64xf32>
    %289 = arith.truncf %288 : vector<16x64xf32> to vector<16x64xbf16>
    %c1_129 = arith.constant 1 : index
    %c0_130 = arith.constant 0 : index
    %c0_131 = arith.constant 0 : index
    %290 = vector.load %arg12[%c1_129, %c0_130, %c0_131] : memref<2x64x32xbf16, #tpu.memory_space<vmem>>, vector<1x64x32xbf16>
    %291 = vector.shape_cast %290 : vector<1x64x32xbf16> to vector<64x32xbf16>
    %cst_132 = arith.constant dense<0.000000e+00> : vector<16x32xf32>
    %292 = tpu.matmul %289, %291, %cst_132 {dimension_numbers = #tpu.dot_dimension_numbers<[1], [0], [0], [1], [0, 0, 1, 1], [], []>} : vector<16x64xbf16>, vector<64x32xbf16>, vector<16x32xf32> -> vector<16x32xf32>
    %c1_133 = arith.constant 1 : index
    %c0_134 = arith.constant 0 : index
    %c0_135 = arith.constant 0 : index
    %293 = vector.load %arg13[%c1_133, %c0_134, %c0_135] : memref<2x1x32xf32, #tpu.memory_space<vmem>>, vector<1x1x32xf32>
    %294 = vector.shape_cast %293 : vector<1x1x32xf32> to vector<1x32xf32>
    %295 = vector.broadcast %294 : vector<1x32xf32> to vector<16x32xf32>
    %296 = arith.addf %292, %295 : vector<16x32xf32>
    %297 = arith.addf %296, %267 : vector<16x32xf32>
    %c1_136 = arith.constant 1 : index
    %c0_137 = arith.constant 0 : index
    %c0_138 = arith.constant 0 : index
    %298 = vector.load %arg14[%c1_136, %c0_137, %c0_138] : memref<2x1x32xf32, #tpu.memory_space<vmem>>, vector<1x1x32xf32>
    %299 = vector.shape_cast %298 : vector<1x1x32xf32> to vector<1x32xf32>
    %c1_139 = arith.constant 1 : index
    %c0_140 = arith.constant 0 : index
    %c0_141 = arith.constant 0 : index
    %300 = vector.load %arg15[%c1_139, %c0_140, %c0_141] : memref<2x1x32xf32, #tpu.memory_space<vmem>>, vector<1x1x32xf32>
    %301 = vector.shape_cast %300 : vector<1x1x32xf32> to vector<1x32xf32>
    %cst_142 = arith.constant dense<0.000000e+00> : vector<16xf32>
    %302 = vector.multi_reduction <add>, %297, %cst_142 [1] : vector<16x32xf32> to vector<16xf32>
    %303 = vector.shape_cast %302 : vector<16xf32> to vector<16x1xf32>
    %cst_143 = arith.constant 3.200000e+01 : f32
    %304 = vector.broadcast %cst_143 : f32 to vector<16x1xf32>
    %305 = arith.divf %303, %304 : vector<16x1xf32>
    %306 = vector.broadcast %305 : vector<16x1xf32> to vector<16x32xf32>
    %307 = arith.subf %297, %306 : vector<16x32xf32>
    %308 = arith.mulf %307, %307 : vector<16x32xf32>
    %cst_144 = arith.constant dense<0.000000e+00> : vector<16xf32>
    %309 = vector.multi_reduction <add>, %308, %cst_144 [1] : vector<16x32xf32> to vector<16xf32>
    %310 = vector.shape_cast %309 : vector<16xf32> to vector<16x1xf32>
    %cst_145 = arith.constant 3.200000e+01 : f32
    %311 = vector.broadcast %cst_145 : f32 to vector<16x1xf32>
    %312 = arith.divf %310, %311 : vector<16x1xf32>
    %cst_146 = arith.constant 9.99999996E-13 : f32
    %313 = vector.broadcast %cst_146 : f32 to vector<16x1xf32>
    %314 = arith.addf %312, %313 : vector<16x1xf32>
    %315 = math.rsqrt %314 : vector<16x1xf32>
    %316 = vector.broadcast %315 : vector<16x1xf32> to vector<16x32xf32>
    %317 = arith.mulf %307, %316 : vector<16x32xf32>
    %318 = vector.broadcast %299 : vector<1x32xf32> to vector<16x32xf32>
    %319 = arith.mulf %317, %318 : vector<16x32xf32>
    %320 = vector.broadcast %301 : vector<1x32xf32> to vector<16x32xf32>
    %321 = arith.addf %319, %320 : vector<16x32xf32>
    %322 = vector.shape_cast %321 : vector<16x32xf32> to vector<2x8x32xf32>
    %323 = vector.extract_strided_slice %322 {offsets = [0, 0, 0], sizes = [2, 1, 32], strides = [1, 1, 1]} : vector<2x8x32xf32> to vector<2x1x32xf32>
    %324 = vector.shape_cast %323 : vector<2x1x32xf32> to vector<2x32xf32>
    %325 = arith.truncf %324 : vector<2x32xf32> to vector<2x32xbf16>
    %c0_147 = arith.constant 0 : index
    %c0_148 = arith.constant 0 : index
    %326 = vector.load %arg16[%c0_147, %c0_148] : memref<32x32xbf16, #tpu.memory_space<vmem>>, vector<32x32xbf16>
    %cst_149 = arith.constant dense<0.000000e+00> : vector<2x32xf32>
    %327 = tpu.matmul %325, %326, %cst_149 {dimension_numbers = #tpu.dot_dimension_numbers<[1], [0], [0], [1], [0, 0, 1, 1], [], []>} : vector<2x32xbf16>, vector<32x32xbf16>, vector<2x32xf32> -> vector<2x32xf32>
    %c0_150 = arith.constant 0 : index
    %c0_151 = arith.constant 0 : index
    %328 = vector.load %arg17[%c0_150, %c0_151] : memref<1x32xf32, #tpu.memory_space<vmem>>, vector<1x32xf32>
    %329 = vector.broadcast %328 : vector<1x32xf32> to vector<2x32xf32>
    %330 = arith.addf %327, %329 : vector<2x32xf32>
    %331 = math.tanh %330 : vector<2x32xf32>
    %332 = arith.truncf %331 : vector<2x32xf32> to vector<2x32xbf16>
    %c0_152 = arith.constant 0 : index
    %c0_153 = arith.constant 0 : index
    %333 = vector.load %arg18[%c0_152, %c0_153] : memref<32x128xbf16, #tpu.memory_space<vmem>>, vector<32x128xbf16>
    %cst_154 = arith.constant dense<0.000000e+00> : vector<2x128xf32>
    %334 = tpu.matmul %332, %333, %cst_154 {dimension_numbers = #tpu.dot_dimension_numbers<[1], [0], [0], [1], [0, 0, 1, 1], [], []>} : vector<2x32xbf16>, vector<32x128xbf16>, vector<2x128xf32> -> vector<2x128xf32>
    %c0_155 = arith.constant 0 : index
    %c0_156 = arith.constant 0 : index
    %335 = vector.load %arg19[%c0_155, %c0_156] : memref<1x128xf32, #tpu.memory_space<vmem>>, vector<1x128xf32>
    %336 = vector.broadcast %335 : vector<1x128xf32> to vector<2x128xf32>
    %337 = arith.addf %334, %336 : vector<2x128xf32>
    %cst_157 = arith.constant dense<0xFF800000> : vector<2xf32>
    %338 = vector.multi_reduction <maximumf>, %337, %cst_157 [1] : vector<2x128xf32> to vector<2xf32>
    %339 = vector.shape_cast %338 : vector<2xf32> to vector<2x1xf32>
    %340 = vector.broadcast %339 : vector<2x1xf32> to vector<2x128xf32>
    %341 = arith.subf %337, %340 : vector<2x128xf32>
    %342 = math.exp %341 : vector<2x128xf32>
    %cst_158 = arith.constant dense<0.000000e+00> : vector<2xf32>
    %343 = vector.multi_reduction <add>, %342, %cst_158 [1] : vector<2x128xf32> to vector<2xf32>
    %344 = vector.shape_cast %343 : vector<2xf32> to vector<2x1xf32>
    %345 = vector.broadcast %344 : vector<2x1xf32> to vector<2x128xf32>
    %346 = arith.divf %342, %345 : vector<2x128xf32>
    %c0_159 = arith.constant 0 : index
    %c0_160 = arith.constant 0 : index
    %c0_161 = arith.constant 0 : index
    %347 = vector.load %arg20[%c0_159, %c0_160, %c0_161] : memref<2x2x128xf32, #tpu.memory_space<vmem>>, vector<1x2x128xf32>
    %348 = vector.shape_cast %347 : vector<1x2x128xf32> to vector<2x128xf32>
    %349 = vector.shape_cast %337 : vector<2x128xf32> to vector<1x2x128xf32>
    tpu.vector_store %arg20[%c0_159, %c0_160, %c0_161], %349 {strides = array<i32>} : memref<2x2x128xf32, #tpu.memory_space<vmem>>, vector<1x2x128xf32>,
    %c1_162 = arith.constant 1 : index
    %c0_163 = arith.constant 0 : index
    %c0_164 = arith.constant 0 : index
    %350 = vector.load %arg20[%c1_162, %c0_163, %c0_164] : memref<2x2x128xf32, #tpu.memory_space<vmem>>, vector<1x2x128xf32>
    %351 = vector.shape_cast %350 : vector<1x2x128xf32> to vector<2x128xf32>
    %352 = vector.shape_cast %346 : vector<2x128xf32> to vector<1x2x128xf32>
    tpu.vector_store %arg20[%c1_162, %c0_163, %c0_164], %352 {strides = array<i32>} : memref<2x2x128xf32, #tpu.memory_space<vmem>>, vector<1x2x128xf32>,
    return
  }
}

</mosaic_0001>

<llo_original>
// kernel: bert_fc_forward.1
$region0: #{bert_fc_forward.1}
  #allocation0 [shape = 'u32[]', space=smem, size = 0x4, offset = 0x4, fixed_abs, tag = 'smem constant byte address 0x4 - core index']
  #allocation1 [shape = 'u32[144,128]{1,0:T(1,128)}', space=vmem, size = 0x12000, scoped, tag = 'internal scratch']
  %s0 = inlined_call_operand.vmem [shape: f32[16,32], index: 0, kind: input, shape index: {}]
  %s1 = inlined_call_operand.vmem [shape: f32[2,1,8], index: 1, kind: input, shape index: {}]
  %s2 = inlined_call_operand.vmem [shape: f32[1,32], index: 2, kind: input, shape index: {}]
  %s3 = inlined_call_operand.vmem [shape: f32[1,32], index: 3, kind: input, shape index: {}]
  %s4 = inlined_call_operand.vmem [shape: bf16[2,32,96], index: 4, kind: input, shape index: {}]
  %s5 = inlined_call_operand.vmem [shape: f32[2,1,96], index: 5, kind: input, shape index: {}]
  %s6 = inlined_call_operand.vmem [shape: bf16[2,2,16,32], index: 6, kind: input, shape index: {}]
  %s7 = inlined_call_operand.vmem [shape: f32[2,1,32], index: 7, kind: input, shape index: {}]
  %s8 = inlined_call_operand.vmem [shape: f32[2,1,32], index: 8, kind: input, shape index: {}]
  %s9 = inlined_call_operand.vmem [shape: f32[2,1,32], index: 9, kind: input, shape index: {}]
  %s10 = inlined_call_operand.vmem [shape: bf16[2,32,64], index: 10, kind: input, shape index: {}]
  %s11 = inlined_call_operand.vmem [shape: f32[2,1,64], index: 11, kind: input, shape index: {}]
  %s12 = inlined_call_operand.vmem [shape: bf16[2,64,32], index: 12, kind: input, shape index: {}]
  %s13 = inlined_call_operand.vmem [shape: f32[2,1,32], index: 13, kind: input, shape index: {}]
  %s14 = inlined_call_operand.vmem [shape: f32[2,1,32], index: 14, kind: input, shape index: {}]
  %s15 = inlined_call_operand.vmem [shape: f32[2,1,32], index: 15, kind: input, shape index: {}]
  %s16 = inlined_call_operand.vmem [shape: bf16[32,32], index: 16, kind: input, shape index: {}]
  %s17 = inlined_call_operand.vmem [shape: f32[1,32], index: 17, kind: input, shape index: {}]
  %s18 = inlined_call_operand.vmem [shape: bf16[32,128], index: 18, kind: input, shape index: {}]
  %s19 = inlined_call_operand.vmem [shape: f32[1,128], index: 19, kind: input, shape index: {}]
  %s20 = inlined_call_operand.vmem [shape: f32[2,2,128], index: 20, kind: output, shape index: {}]
  %s21 = sld [smem:[#allocation0]]
  $region90: #{bert_fc_forward.1} parent=0
    _
  %s23 = ssub.s32 1, %s21
  %s24 = scalar_select 0, %s23, %s21
  // Predicated region
  $region2: #{bert_fc_forward.1} parent=0 // pred_check
    _
  $region3: #{bert_fc_forward.1} parent=0 // pred_check_branch
    %26 = sbr.rel (0) target = $region5
  $region4: #{bert_fc_forward.1} parent=0 // pred_region
    _
  $region5: #{bert_fc_forward.1} parent=0 // pred_fallthru
    _
  // Predicated region
  $region6: #{bert_fc_forward.1} parent=0 // pred_check
    _
  $region7: #{bert_fc_forward.1} parent=0 // pred_check_branch
    %28 = sbr.rel (0) target = $region9
  $region8: #{bert_fc_forward.1} parent=0 // pred_region
    _
  $region9: #{bert_fc_forward.1} parent=0 // pred_fallthru
    _
  // Predicated region
  $region10: #{bert_fc_forward.1} parent=0 // pred_check
    _
  $region11: #{bert_fc_forward.1} parent=0 // pred_check_branch
    %30 = sbr.rel (0) target = $region13
  $region12: #{bert_fc_forward.1} parent=0 // pred_region
    _
  $region13: #{bert_fc_forward.1} parent=0 // pred_fallthru
    _
  // Predicated region
  $region14: #{bert_fc_forward.1} parent=0 // pred_check
    _
  $region15: #{bert_fc_forward.1} parent=0 // pred_check_branch
    %32 = sbr.rel (0) target = $region17
  $region16: #{bert_fc_forward.1} parent=0 // pred_region
    _
  $region17: #{bert_fc_forward.1} parent=0 // pred_fallthru
    _
  // Predicated region
  $region18: #{bert_fc_forward.1} parent=0 // pred_check
    _
  $region19: #{bert_fc_forward.1} parent=0 // pred_check_branch
    %34 = sbr.rel (0) target = $region21
  $region20: #{bert_fc_forward.1} parent=0 // pred_region
    _
  $region21: #{bert_fc_forward.1} parent=0 // pred_fallthru
    _
  // Predicated region
  $region22: #{bert_fc_forward.1} parent=0 // pred_check
    _
  $region23: #{bert_fc_forward.1} parent=0 // pred_check_branch
    %36 = sbr.rel (0) target = $region25
  $region24: #{bert_fc_forward.1} parent=0 // pred_region
    _
  $region25: #{bert_fc_forward.1} parent=0 // pred_fallthru
    _
  // Predicated region
  $region26: #{bert_fc_forward.1} parent=0 // pred_check
    _
  $region27: #{bert_fc_forward.1} parent=0 // pred_check_branch
    %38 = sbr.rel (0) target = $region29
  $region28: #{bert_fc_forward.1} parent=0 // pred_region
    _
  $region29: #{bert_fc_forward.1} parent=0 // pred_fallthru
    _
  // Predicated region
  $region30: #{bert_fc_forward.1} parent=0 // pred_check
    _
  $region31: #{bert_fc_forward.1} parent=0 // pred_check_branch
    %40 = sbr.rel (0) target = $region33
  $region32: #{bert_fc_forward.1} parent=0 // pred_region
    _
  $region33: #{bert_fc_forward.1} parent=0 // pred_fallthru
    _
  // Predicated region
  $region34: #{bert_fc_forward.1} parent=0 // pred_check
    _
  $region35: #{bert_fc_forward.1} parent=0 // pred_check_branch
    %42 = sbr.rel (0) target = $region37
  $region36: #{bert_fc_forward.1} parent=0 // pred_region
    _
  $region37: #{bert_fc_forward.1} parent=0 // pred_fallthru
    _
  // Predicated region
  $region38: #{bert_fc_forward.1} parent=0 // pred_check
    _
  $region39: #{bert_fc_forward.1} parent=0 // pred_check_branch
    %44 = sbr.rel (0) target = $region41
  $region40: #{bert_fc_forward.1} parent=0 // pred_region
    _
  $region41: #{bert_fc_forward.1} parent=0 // pred_fallthru
    _
  // Predicated region
  $region42: #{bert_fc_forward.1} parent=0 // pred_check
    _
  $region43: #{bert_fc_forward.1} parent=0 // pred_check_branch
    %46 = sbr.rel (0) target = $region45
  $region44: #{bert_fc_forward.1} parent=0 // pred_region
    _
  $region45: #{bert_fc_forward.1} parent=0 // pred_fallthru
    _
  // Predicated region
  $region46: #{bert_fc_forward.1} parent=0 // pred_check
    _
  $region47: #{bert_fc_forward.1} parent=0 // pred_check_branch
    %48 = sbr.rel (0) target = $region49
  $region48: #{bert_fc_forward.1} parent=0 // pred_region
    _
  $region49: #{bert_fc_forward.1} parent=0 // pred_fallthru
    _
  // Predicated region
  $region50: #{bert_fc_forward.1} parent=0 // pred_check
    _
  $region51: #{bert_fc_forward.1} parent=0 // pred_check_branch
    %50 = sbr.rel (0) target = $region53
  $region52: #{bert_fc_forward.1} parent=0 // pred_region
    _
  $region53: #{bert_fc_forward.1} parent=0 // pred_fallthru
    _
  // Predicated region
  $region54: #{bert_fc_forward.1} parent=0 // pred_check
    _
  $region55: #{bert_fc_forward.1} parent=0 // pred_check_branch
    %52 = sbr.rel (0) target = $region57
  $region56: #{bert_fc_forward.1} parent=0 // pred_region
    _
  $region57: #{bert_fc_forward.1} parent=0 // pred_fallthru
    _
  // Predicated region
  $region58: #{bert_fc_forward.1} parent=0 // pred_check
    _
  $region59: #{bert_fc_forward.1} parent=0 // pred_check_branch
    %54 = sbr.rel (0) target = $region61
  $region60: #{bert_fc_forward.1} parent=0 // pred_region
    _
  $region61: #{bert_fc_forward.1} parent=0 // pred_fallthru
    _
  // Predicated region
  $region62: #{bert_fc_forward.1} parent=0 // pred_check
    _
  $region63: #{bert_fc_forward.1} parent=0 // pred_check_branch
    %56 = sbr.rel (0) target = $region65
  $region64: #{bert_fc_forward.1} parent=0 // pred_region
    _
  $region65: #{bert_fc_forward.1} parent=0 // pred_fallthru
    _
  // Predicated region
  $region66: #{bert_fc_forward.1} parent=0 // pred_check
    _
  $region67: #{bert_fc_forward.1} parent=0 // pred_check_branch
    %58 = sbr.rel (0) target = $region69
  $region68: #{bert_fc_forward.1} parent=0 // pred_region
    _
  $region69: #{bert_fc_forward.1} parent=0 // pred_fallthru
    _
  // Predicated region
  $region70: #{bert_fc_forward.1} parent=0 // pred_check
    _
  $region71: #{bert_fc_forward.1} parent=0 // pred_check_branch
    %60 = sbr.rel (0) target = $region73
  $region72: #{bert_fc_forward.1} parent=0 // pred_region
    _
  $region73: #{bert_fc_forward.1} parent=0 // pred_fallthru
    _
  // Predicated region
  $region74: #{bert_fc_forward.1} parent=0 // pred_check
    _
  $region75: #{bert_fc_forward.1} parent=0 // pred_check_branch
    %62 = sbr.rel (0) target = $region77
  $region76: #{bert_fc_forward.1} parent=0 // pred_region
    _
  $region77: #{bert_fc_forward.1} parent=0 // pred_fallthru
    _
  // Predicated region
  $region78: #{bert_fc_forward.1} parent=0 // pred_check
    _
  $region79: #{bert_fc_forward.1} parent=0 // pred_check_branch
    %64 = sbr.rel (0) target = $region81
  $region80: #{bert_fc_forward.1} parent=0 // pred_region
    _
  $region81: #{bert_fc_forward.1} parent=0 // pred_fallthru
    _
  %v66 = vld [vmem:[%s0] sm:$0xff]
  %v67 = vld [vmem:[%s0 + $0x8] sm:$0xff]
  %v68 = vld [vmem:[%s2] sm:$0x1]
  %v69 = vld [vmem:[%s3] sm:$0x1]
  %vm70 = vcmask 261120
  %v71 = vsel %vm70, %v66, 0.0
  %72 = vadd.xlane.f32.xlu0 %v71
  %v73 = vpop.xlane.xlu0 %72
  %v74 = vsel %vm70, %v67, 0.0
  %75 = vadd.xlane.f32.xlu0 %v74
  %v76 = vpop.xlane.xlu0 %75
  %v77 = vrcp.pop 32.0
  %v78 = vmul.f32 %v73, %v77
  %v79 = vmul.f32 %v76, %v77
  %v80 = vsub.f32 %v66, %v78
  %v81 = vsub.f32 %v67, %v79
  %v82 = vmul.f32 %v80, %v80
  %v83 = vmul.f32 %v81, %v81
  %v84 = vsel %vm70, %v82, 0.0
  %85 = vadd.xlane.f32.xlu0 %v84
  %v86 = vpop.xlane.xlu0 %85
  %v87 = vsel %vm70, %v83, 0.0
  %88 = vadd.xlane.f32.xlu0 %v87
  %v89 = vpop.xlane.xlu0 %88
  %v90 = vmul.f32 %v86, %v77
  %v91 = vmul.f32 %v89, %v77
  %v92 = vadd.f32 %v90, 1e-12
  %v93 = vadd.f32 %v91, 1e-12
  %v94 = vrsqrt.pop %v92
  %v95 = vrsqrt.pop %v93
  %v96 = vmul.f32 %v80, %v94
  %v97 = vmul.f32 %v81, %v95
  %v99 = vlaneseq
  %v100 = vshrl.u32 %v99, 7
  %v101 = vsub.s32 0, %v100
  %v102 = vrot.slane %v68, %v101
  %v104 = vmul.f32 %v96, %v102
  %v105 = vmul.f32 %v97, %v102
  %v107 = vlaneseq
  %v108 = vshrl.u32 %v107, 7
  %v109 = vsub.s32 0, %v108
  %v110 = vrot.slane %v69, %v109
  %v112 = vadd.f32 %v104, %v110
  %v113 = vadd.f32 %v105, %v110
  %v114 = vld [vmem:[%s1] sm:$0x1]
  %v115 = vld [vmem:[%s1 + $0x1] sm:$0x1]
  %v118 = vlaneseq
  %v119 = vshrl.u32 %v118, 7
  %v120 = vsub.s32 0, %v119
  %v121 = vrot.slane %v114, %v120
  %v122 = vlaneseq
  %v123 = vshrl.u32 %v122, 7
  %v124 = vsub.s32 0, %v123
  %v125 = vrot.slane %v115, %v124
  %v128 = vpack.c.bf16 %v113, %v112
  %v129 = vld [vmem:[%s4] sm:$0xf]
  %v130 = vld [vmem:[%s4 + $0x4] sm:$0xf]
  %v131 = vld [vmem:[%s4 + $0x8] sm:$0xf]
  %v132 = vld [vmem:[%s4 + $0xc] sm:$0xf]
  %v133 = vld [vmem:[%s5] sm:$0x1]
  %v135 = vlaneseq
  %v136 = vshrl.u32 %v135, 7
  %v137 = vsub.s32 0, %v136
  %v138 = vrot.slane %v133, %v137
  %v144 = vunpack.c.l.b16 %v129
  %v145 = vunpack.c.l.b16 %v130
  %v146 = vunpack.c.l.b16 %v131
  %v147 = vunpack.c.l.b16 %v132
  %v148 = vpack.c.b16 %v145, %v144
  %v149 = vpack.c.b16 %v147, %v146
  %v153 = vsel %vm70, %v128, 0
  %155 = vmatprep.subr.bf16.mxu0 0
  %156 = vmatpush1.bf16.msra.mxu0 %v148
  %157 = vmatprep.subr.bf16.mxu0 0
  %158 = vmatpush1.bf16.msra.mxu0 %v149
  %159 = vmatprep.subr.bf16.mxu0 0
  %160 = vmatpush1.bf16.msra.mxu0 0
  %161 = vmatprep.subr.bf16.mxu0 0
  %162 = vmatpush1.bf16.msra.mxu0 0
  %163 = vmatprep.subr.bf16.mxu0 0
  %164 = vmatpush1.bf16.msra.mxu0 0
  %165 = vmatprep.subr.bf16.mxu0 0
  %166 = vmatpush1.bf16.msra.mxu0 0
  %167 = vmatprep.subr.bf16.mxu0 0
  %168 = vmatpush1.bf16.msra.mxu0 0
  %169 = vmatprep.subr.bf16.mxu0 0
  %170 = vmatpush1.bf16.msra.mxu0 0
  %171 = vmatprep.subr.bf16.mxu0 0
  %172 = vmatpush1.bf16.msra.mxu0 0
  %173 = vmatprep.subr.bf16.mxu0 0
  %174 = vmatpush1.bf16.msra.mxu0 0
  %175 = vmatprep.subr.bf16.mxu0 0
  %176 = vmatpush1.bf16.msra.mxu0 0
  %177 = vmatprep.subr.bf16.mxu0 0
  %178 = vmatpush1.bf16.msra.mxu0 0
  %179 = vmatprep.subr.bf16.mxu0 0
  %180 = vmatpush1.bf16.msra.mxu0 0
  %181 = vmatprep.subr.bf16.mxu0 0
  %182 = vmatpush1.bf16.msra.mxu0 0
  %183 = vmatprep.subr.bf16.mxu0 0
  %184 = vmatpush1.bf16.msra.mxu0 0
  %185 = vmatprep.subr.bf16.mxu0 0
  %186 = vmatpush1.bf16.msra.mxu0 0
  %187 = vmatprep.mubr.bf16.mxu0 0
  %188 = vmatmul.mubr.bf16.gmra.mrb[0].mxu0 %v153
  %v189 = vpop.f32.mrb[0].mxu0
  %v190 = vadd.f32 %v138, %v189
  %v191 = vpop.f32.mrb[0].mxu0
  %v192 = vpop.f32.mrb[0].mxu0
  %v193 = vadd.f32 %v138, %v192
  %v194 = vpop.f32.mrb[0].mxu0
  %195 = vdwg.mxu0
  %v196 = vld [vmem:[%s7] sm:$0x1]
  %v197 = vpack.c.bf16 %v190, %v190
  %v198 = vpack.c.bf16 %v193, %v193
  %200 = vrot.lane.b32.xlu0 %v197, 96
  %v201 = vpop.permute.xlu0 %200
  %vm202 = vcmask 130048
  %v204 = vsel %vm202, %v197, 0
  %v207 = vsel %vm202, %v201, 0
  %209 = vmatprep.subr.bf16.mxu0 0
  %210 = vmatpush1.bf16.xpose.msra.mxu0 %v207
  %211 = vmatprep.subr.bf16.mxu0 0
  %212 = vmatpush1.bf16.xpose.msra.mxu0 0
  %213 = vmatprep.subr.bf16.mxu0 0
  %214 = vmatpush1.bf16.xpose.msra.mxu0 0
  %215 = vmatprep.subr.bf16.mxu0 0
  %216 = vmatpush1.bf16.xpose.msra.mxu0 0
  %217 = vmatprep.subr.bf16.mxu0 0
  %218 = vmatpush1.bf16.xpose.msra.mxu0 0
  %219 = vmatprep.subr.bf16.mxu0 0
  %220 = vmatpush1.bf16.xpose.msra.mxu0 0
  %221 = vmatprep.subr.bf16.mxu0 0
  %222 = vmatpush1.bf16.xpose.msra.mxu0 0
  %223 = vmatprep.subr.bf16.mxu0 0
  %224 = vmatpush1.bf16.xpose.msra.mxu0 0
  %225 = vmatprep.subr.bf16.mxu0 0
  %226 = vmatpush1.bf16.xpose.msra.mxu0 0
  %227 = vmatprep.subr.bf16.mxu0 0
  %228 = vmatpush1.bf16.xpose.msra.mxu0 0
  %229 = vmatprep.subr.bf16.mxu0 0
  %230 = vmatpush1.bf16.xpose.msra.mxu0 0
  %231 = vmatprep.subr.bf16.mxu0 0
  %232 = vmatpush1.bf16.xpose.msra.mxu0 0
  %233 = vmatprep.subr.bf16.mxu0 0
  %234 = vmatpush1.bf16.xpose.msra.mxu0 0
  %235 = vmatprep.subr.bf16.mxu0 0
  %236 = vmatpush1.bf16.xpose.msra.mxu0 0
  %237 = vmatprep.subr.bf16.mxu0 0
  %238 = vmatpush1.bf16.xpose.msra.mxu0 0
  %239 = vmatprep.subr.bf16.mxu0 0
  %240 = vmatpush1.bf16.xpose.msra.mxu0 0
  %241 = vmatprep.mubr.bf16.mxu0 0
  %242 = vmatmul.mubr.bf16.gmra.mrb[0].mxu0 %v204
  %v243 = vpop.f32.mrb[0].mxu0
  %v244 = vadd.f32 %v121, %v243
  %v245 = vpop.f32.mrb[0].mxu0
  %v246 = vpop.f32.mrb[0].mxu0
  %v247 = vpop.f32.mrb[0].mxu0
  %248 = vdwg.mxu0
  %250 = vrot.lane.b32.xlu0 %v198, 96
  %v251 = vpop.permute.xlu0 %250
  %v253 = vsel %vm202, %v198, 0
  %v256 = vsel %vm202, %v251, 0
  %258 = vmatprep.subr.bf16.mxu0 0
  %259 = vmatpush1.bf16.xpose.msra.mxu0 %v256
  %260 = vmatprep.subr.bf16.mxu0 0
  %261 = vmatpush1.bf16.xpose.msra.mxu0 0
  %262 = vmatprep.subr.bf16.mxu0 0
  %263 = vmatpush1.bf16.xpose.msra.mxu0 0
  %264 = vmatprep.subr.bf16.mxu0 0
  %265 = vmatpush1.bf16.xpose.msra.mxu0 0
  %266 = vmatprep.subr.bf16.mxu0 0
  %267 = vmatpush1.bf16.xpose.msra.mxu0 0
  %268 = vmatprep.subr.bf16.mxu0 0
  %269 = vmatpush1.bf16.xpose.msra.mxu0 0
  %270 = vmatprep.subr.bf16.mxu0 0
  %271 = vmatpush1.bf16.xpose.msra.mxu0 0
  %272 = vmatprep.subr.bf16.mxu0 0
  %273 = vmatpush1.bf16.xpose.msra.mxu0 0
  %274 = vmatprep.subr.bf16.mxu0 0
  %275 = vmatpush1.bf16.xpose.msra.mxu0 0
  %276 = vmatprep.subr.bf16.mxu0 0
  %277 = vmatpush1.bf16.xpose.msra.mxu0 0
  %278 = vmatprep.subr.bf16.mxu0 0
  %279 = vmatpush1.bf16.xpose.msra.mxu0 0
  %280 = vmatprep.subr.bf16.mxu0 0
  %281 = vmatpush1.bf16.xpose.msra.mxu0 0
  %282 = vmatprep.subr.bf16.mxu0 0
  %283 = vmatpush1.bf16.xpose.msra.mxu0 0
  %284 = vmatprep.subr.bf16.mxu0 0
  %285 = vmatpush1.bf16.xpose.msra.mxu0 0
  %286 = vmatprep.subr.bf16.mxu0 0
  %287 = vmatpush1.bf16.xpose.msra.mxu0 0
  %288 = vmatprep.subr.bf16.mxu0 0
  %289 = vmatpush1.bf16.xpose.msra.mxu0 0
  %290 = vmatprep.mubr.bf16.mxu0 0
  %291 = vmatmul.mubr.bf16.gmra.mrb[0].mxu0 %v253
  %v292 = vpop.f32.mrb[0].mxu0
  %v293 = vadd.f32 %v125, %v292
  %v294 = vpop.f32.mrb[0].mxu0
  %v295 = vpop.f32.mrb[0].mxu0
  %v296 = vpop.f32.mrb[0].mxu0
  %297 = vdwg.mxu0
  %vm298 = vcmask 64512
  %v299 = vsel %vm298, %v244, -inf
  %300 = vmax.xlane.f32.xlu0 %v299
  %v301 = vpop.xlane.xlu0 %300
  %v302 = vsel %vm298, %v293, -inf
  %303 = vmax.xlane.f32.xlu0 %v302
  %v304 = vpop.xlane.xlu0 %303
  %v305 = vsub.f32 %v244, %v301
  %v306 = vsub.f32 %v293, %v304
  %v307 = vmul.f32 %v305, 1.442695
  %v308 = vpow.pop %v307
  %v309 = vmul.f32 %v306, 1.442695
  %v310 = vpow.pop %v309
  %v311 = vsel %vm298, %v308, 0.0
  %312 = vadd.xlane.f32.xlu0 %v311
  %v313 = vpop.xlane.xlu0 %312
  %v314 = vsel %vm298, %v310, 0.0
  %315 = vadd.xlane.f32.xlu0 %v314
  %v316 = vpop.xlane.xlu0 %315
  %v317 = vrcp.pop %v313
  %v318 = vrcp.pop %v316
  %v319 = vmul.f32 %v308, %v317
  %v320 = vmul.f32 %v310, %v318
  %v321 = vpack.c.bf16 %v319, %v319
  %v322 = vpack.c.bf16 %v320, %v320
  %323 = vrot.lane.b32.xlu0 %v197, 64
  %v324 = vpop.permute.xlu0 %323
  %v326 = vsel %vm298, %v321, 0
  %vm328 = vcmask 1043456
  %v330 = vsel %vm328, %v324, 0
  %332 = vmatprep.subr.bf16.mxu0 0
  %333 = vmatpush1.bf16.msra.mxu0 %v330
  %334 = vmatprep.subr.bf16.mxu0 0
  %335 = vmatpush1.bf16.msra.mxu0 0
  %336 = vmatprep.subr.bf16.mxu0 0
  %337 = vmatpush1.bf16.msra.mxu0 0
  %338 = vmatprep.subr.bf16.mxu0 0
  %339 = vmatpush1.bf16.msra.mxu0 0
  %340 = vmatprep.subr.bf16.mxu0 0
  %341 = vmatpush1.bf16.msra.mxu0 0
  %342 = vmatprep.subr.bf16.mxu0 0
  %343 = vmatpush1.bf16.msra.mxu0 0
  %344 = vmatprep.subr.bf16.mxu0 0
  %345 = vmatpush1.bf16.msra.mxu0 0
  %346 = vmatprep.subr.bf16.mxu0 0
  %347 = vmatpush1.bf16.msra.mxu0 0
  %348 = vmatprep.subr.bf16.mxu0 0
  %349 = vmatpush1.bf16.msra.mxu0 0
  %350 = vmatprep.subr.bf16.mxu0 0
  %351 = vmatpush1.bf16.msra.mxu0 0
  %352 = vmatprep.subr.bf16.mxu0 0
  %353 = vmatpush1.bf16.msra.mxu0 0
  %354 = vmatprep.subr.bf16.mxu0 0
  %355 = vmatpush1.bf16.msra.mxu0 0
  %356 = vmatprep.subr.bf16.mxu0 0
  %357 = vmatpush1.bf16.msra.mxu0 0
  %358 = vmatprep.subr.bf16.mxu0 0
  %359 = vmatpush1.bf16.msra.mxu0 0
  %360 = vmatprep.subr.bf16.mxu0 0
  %361 = vmatpush1.bf16.msra.mxu0 0
  %362 = vmatprep.subr.bf16.mxu0 0
  %363 = vmatpush1.bf16.msra.mxu0 0
  %364 = vmatprep.mubr.bf16.mxu0 0
  %365 = vmatmul.mubr.bf16.gmra.mrb[0].mxu0 %v326
  %v366 = vpop.f32.mrb[0].mxu0
  %v367 = vadd.f32 0.0, %v366
  %v368 = vpop.f32.mrb[0].mxu0
  %v369 = vpop.f32.mrb[0].mxu0
  %v370 = vpop.f32.mrb[0].mxu0
  %371 = vdwg.mxu0
  %372 = vrot.lane.b32.xlu0 %v198, 64
  %v373 = vpop.permute.xlu0 %372
  %v375 = vsel %vm298, %v322, 0
  %v378 = vsel %vm328, %v373, 0
  %380 = vmatprep.subr.bf16.mxu0 0
  %381 = vmatpush1.bf16.msra.mxu0 %v378
  %382 = vmatprep.subr.bf16.mxu0 0
  %383 = vmatpush1.bf16.msra.mxu0 0
  %384 = vmatprep.subr.bf16.mxu0 0
  %385 = vmatpush1.bf16.msra.mxu0 0
  %386 = vmatprep.subr.bf16.mxu0 0
  %387 = vmatpush1.bf16.msra.mxu0 0
  %388 = vmatprep.subr.bf16.mxu0 0
  %389 = vmatpush1.bf16.msra.mxu0 0
  %390 = vmatprep.subr.bf16.mxu0 0
  %391 = vmatpush1.bf16.msra.mxu0 0
  %392 = vmatprep.subr.bf16.mxu0 0
  %393 = vmatpush1.bf16.msra.mxu0 0
  %394 = vmatprep.subr.bf16.mxu0 0
  %395 = vmatpush1.bf16.msra.mxu0 0
  %396 = vmatprep.subr.bf16.mxu0 0
  %397 = vmatpush1.bf16.msra.mxu0 0
  %398 = vmatprep.subr.bf16.mxu0 0
  %399 = vmatpush1.bf16.msra.mxu0 0
  %400 = vmatprep.subr.bf16.mxu0 0
  %401 = vmatpush1.bf16.msra.mxu0 0
  %402 = vmatprep.subr.bf16.mxu0 0
  %403 = vmatpush1.bf16.msra.mxu0 0
  %404 = vmatprep.subr.bf16.mxu0 0
  %405 = vmatpush1.bf16.msra.mxu0 0
  %406 = vmatprep.subr.bf16.mxu0 0
  %407 = vmatpush1.bf16.msra.mxu0 0
  %408 = vmatprep.subr.bf16.mxu0 0
  %409 = vmatpush1.bf16.msra.mxu0 0
  %410 = vmatprep.subr.bf16.mxu0 0
  %411 = vmatpush1.bf16.msra.mxu0 0
  %412 = vmatprep.mubr.bf16.mxu0 0
  %413 = vmatmul.mubr.bf16.gmra.mrb[0].mxu0 %v375
  %v414 = vpop.f32.mrb[0].mxu0
  %v415 = vadd.f32 0.0, %v414
  %v416 = vpop.f32.mrb[0].mxu0
  %v417 = vpop.f32.mrb[0].mxu0
  %v418 = vpop.f32.mrb[0].mxu0
  %419 = vdwg.mxu0
  %v420 = vpack.c.bf16 %v415, %v367
  %v421 = vld [vmem:[%s6] sm:$0xf]
  %v422 = vld [vmem:[%s6 + $0x4] sm:$0xf]
  %v425 = vunpack.c.l.b16 %v421
  %v426 = vunpack.c.l.b16 %v422
  %v427 = vpack.c.b16 %v426, %v425
  %v430 = vsel %vm202, %v420, 0
  %432 = vmatprep.subr.bf16.mxu0 0
  %433 = vmatpush1.bf16.msra.mxu0 %v427
  %434 = vmatprep.subr.bf16.mxu0 0
  %435 = vmatpush1.bf16.msra.mxu0 0
  %436 = vmatprep.subr.bf16.mxu0 0
  %437 = vmatpush1.bf16.msra.mxu0 0
  %438 = vmatprep.subr.bf16.mxu0 0
  %439 = vmatpush1.bf16.msra.mxu0 0
  %440 = vmatprep.subr.bf16.mxu0 0
  %441 = vmatpush1.bf16.msra.mxu0 0
  %442 = vmatprep.subr.bf16.mxu0 0
  %443 = vmatpush1.bf16.msra.mxu0 0
  %444 = vmatprep.subr.bf16.mxu0 0
  %445 = vmatpush1.bf16.msra.mxu0 0
  %446 = vmatprep.subr.bf16.mxu0 0
  %447 = vmatpush1.bf16.msra.mxu0 0
  %448 = vmatprep.subr.bf16.mxu0 0
  %449 = vmatpush1.bf16.msra.mxu0 0
  %450 = vmatprep.subr.bf16.mxu0 0
  %451 = vmatpush1.bf16.msra.mxu0 0
  %452 = vmatprep.subr.bf16.mxu0 0
  %453 = vmatpush1.bf16.msra.mxu0 0
  %454 = vmatprep.subr.bf16.mxu0 0
  %455 = vmatpush1.bf16.msra.mxu0 0
  %456 = vmatprep.subr.bf16.mxu0 0
  %457 = vmatpush1.bf16.msra.mxu0 0
  %458 = vmatprep.subr.bf16.mxu0 0
  %459 = vmatpush1.bf16.msra.mxu0 0
  %460 = vmatprep.subr.bf16.mxu0 0
  %461 = vmatpush1.bf16.msra.mxu0 0
  %462 = vmatprep.subr.bf16.mxu0 0
  %463 = vmatpush1.bf16.msra.mxu0 0
  %464 = vmatprep.mubr.bf16.mxu0 0
  %465 = vmatmul.mubr.bf16.gmra.mrb[0].mxu0 %v430
  %v466 = vpop.f32.mrb[0].mxu0
  %v467 = vadd.f32 0.0, %v466
  %v468 = vpop.f32.mrb[0].mxu0
  %v469 = vpop.f32.mrb[0].mxu0
  %v470 = vadd.f32 0.0, %v469
  %v471 = vpop.f32.mrb[0].mxu0
  %472 = vdwg.mxu0
  %v474 = vlaneseq
  %v475 = vshrl.u32 %v474, 7
  %v476 = vsub.s32 0, %v475
  %v477 = vrot.slane %v196, %v476
  %v479 = vadd.f32 %v477, %v467
  %v480 = vadd.f32 %v477, %v470
  %481 = vrot.lane.b32.xlu0 %v197, 112
  %v482 = vpop.permute.xlu0 %481
  %483 = vrot.lane.b32.xlu0 %v197, 80
  %v484 = vpop.permute.xlu0 %483
  %v486 = vsel %vm202, %v482, 0
  %v489 = vsel %vm202, %v484, 0
  %491 = vmatprep.subr.bf16.mxu0 0
  %492 = vmatpush1.bf16.xpose.msra.mxu0 %v489
  %493 = vmatprep.subr.bf16.mxu0 0
  %494 = vmatpush1.bf16.xpose.msra.mxu0 0
  %495 = vmatprep.subr.bf16.mxu0 0
  %496 = vmatpush1.bf16.xpose.msra.mxu0 0
  %497 = vmatprep.subr.bf16.mxu0 0
  %498 = vmatpush1.bf16.xpose.msra.mxu0 0
  %499 = vmatprep.subr.bf16.mxu0 0
  %500 = vmatpush1.bf16.xpose.msra.mxu0 0
  %501 = vmatprep.subr.bf16.mxu0 0
  %502 = vmatpush1.bf16.xpose.msra.mxu0 0
  %503 = vmatprep.subr.bf16.mxu0 0
  %504 = vmatpush1.bf16.xpose.msra.mxu0 0
  %505 = vmatprep.subr.bf16.mxu0 0
  %506 = vmatpush1.bf16.xpose.msra.mxu0 0
  %507 = vmatprep.subr.bf16.mxu0 0
  %508 = vmatpush1.bf16.xpose.msra.mxu0 0
  %509 = vmatprep.subr.bf16.mxu0 0
  %510 = vmatpush1.bf16.xpose.msra.mxu0 0
  %511 = vmatprep.subr.bf16.mxu0 0
  %512 = vmatpush1.bf16.xpose.msra.mxu0 0
  %513 = vmatprep.subr.bf16.mxu0 0
  %514 = vmatpush1.bf16.xpose.msra.mxu0 0
  %515 = vmatprep.subr.bf16.mxu0 0
  %516 = vmatpush1.bf16.xpose.msra.mxu0 0
  %517 = vmatprep.subr.bf16.mxu0 0
  %518 = vmatpush1.bf16.xpose.msra.mxu0 0
  %519 = vmatprep.subr.bf16.mxu0 0
  %520 = vmatpush1.bf16.xpose.msra.mxu0 0
  %521 = vmatprep.subr.bf16.mxu0 0
  %522 = vmatpush1.bf16.xpose.msra.mxu0 0
  %523 = vmatprep.mubr.bf16.mxu0 0
  %524 = vmatmul.mubr.bf16.gmra.mrb[0].mxu0 %v486
  %v525 = vpop.f32.mrb[0].mxu0
  %v526 = vadd.f32 %v121, %v525
  %v527 = vpop.f32.mrb[0].mxu0
  %v528 = vpop.f32.mrb[0].mxu0
  %v529 = vpop.f32.mrb[0].mxu0
  %530 = vdwg.mxu0
  %531 = vrot.lane.b32.xlu0 %v198, 112
  %v532 = vpop.permute.xlu0 %531
  %533 = vrot.lane.b32.xlu0 %v198, 80
  %v534 = vpop.permute.xlu0 %533
  %v536 = vsel %vm202, %v532, 0
  %v539 = vsel %vm202, %v534, 0
  %541 = vmatprep.subr.bf16.mxu0 0
  %542 = vmatpush1.bf16.xpose.msra.mxu0 %v539
  %543 = vmatprep.subr.bf16.mxu0 0
  %544 = vmatpush1.bf16.xpose.msra.mxu0 0
  %545 = vmatprep.subr.bf16.mxu0 0
  %546 = vmatpush1.bf16.xpose.msra.mxu0 0
  %547 = vmatprep.subr.bf16.mxu0 0
  %548 = vmatpush1.bf16.xpose.msra.mxu0 0
  %549 = vmatprep.subr.bf16.mxu0 0
  %550 = vmatpush1.bf16.xpose.msra.mxu0 0
  %551 = vmatprep.subr.bf16.mxu0 0
  %552 = vmatpush1.bf16.xpose.msra.mxu0 0
  %553 = vmatprep.subr.bf16.mxu0 0
  %554 = vmatpush1.bf16.xpose.msra.mxu0 0
  %555 = vmatprep.subr.bf16.mxu0 0
  %556 = vmatpush1.bf16.xpose.msra.mxu0 0
  %557 = vmatprep.subr.bf16.mxu0 0
  %558 = vmatpush1.bf16.xpose.msra.mxu0 0
  %559 = vmatprep.subr.bf16.mxu0 0
  %560 = vmatpush1.bf16.xpose.msra.mxu0 0
  %561 = vmatprep.subr.bf16.mxu0 0
  %562 = vmatpush1.bf16.xpose.msra.mxu0 0
  %563 = vmatprep.subr.bf16.mxu0 0
  %564 = vmatpush1.bf16.xpose.msra.mxu0 0
  %565 = vmatprep.subr.bf16.mxu0 0
  %566 = vmatpush1.bf16.xpose.msra.mxu0 0
  %567 = vmatprep.subr.bf16.mxu0 0
  %568 = vmatpush1.bf16.xpose.msra.mxu0 0
  %569 = vmatprep.subr.bf16.mxu0 0
  %570 = vmatpush1.bf16.xpose.msra.mxu0 0
  %571 = vmatprep.subr.bf16.mxu0 0
  %572 = vmatpush1.bf16.xpose.msra.mxu0 0
  %573 = vmatprep.mubr.bf16.mxu0 0
  %574 = vmatmul.mubr.bf16.gmra.mrb[0].mxu0 %v536
  %v575 = vpop.f32.mrb[0].mxu0
  %v576 = vadd.f32 %v125, %v575
  %v577 = vpop.f32.mrb[0].mxu0
  %v578 = vpop.f32.mrb[0].mxu0
  %v579 = vpop.f32.mrb[0].mxu0
  %580 = vdwg.mxu0
  %v581 = vsel %vm298, %v526, -inf
  %582 = vmax.xlane.f32.xlu0 %v581
  %v583 = vpop.xlane.xlu0 %582
  %v584 = vsel %vm298, %v576, -inf
  %585 = vmax.xlane.f32.xlu0 %v584
  %v586 = vpop.xlane.xlu0 %585
  %v587 = vsub.f32 %v526, %v583
  %v588 = vsub.f32 %v576, %v586
  %v589 = vmul.f32 %v587, 1.442695
  %v590 = vpow.pop %v589
  %v591 = vmul.f32 %v588, 1.442695
  %v592 = vpow.pop %v591
  %v593 = vsel %vm298, %v590, 0.0
  %594 = vadd.xlane.f32.xlu0 %v593
  %v595 = vpop.xlane.xlu0 %594
  %v596 = vsel %vm298, %v592, 0.0
  %597 = vadd.xlane.f32.xlu0 %v596
  %v598 = vpop.xlane.xlu0 %597
  %v599 = vrcp.pop %v595
  %v600 = vrcp.pop %v598
  %v601 = vmul.f32 %v590, %v599
  %v602 = vmul.f32 %v592, %v600
  %v603 = vpack.c.bf16 %v601, %v601
  %v604 = vpack.c.bf16 %v602, %v602
  %605 = vrot.lane.b32.xlu0 %v197, 48
  %v606 = vpop.permute.xlu0 %605
  %v608 = vsel %vm298, %v603, 0
  %v611 = vsel %vm328, %v606, 0
  %613 = vmatprep.subr.bf16.mxu0 0
  %614 = vmatpush1.bf16.msra.mxu0 %v611
  %615 = vmatprep.subr.bf16.mxu0 0
  %616 = vmatpush1.bf16.msra.mxu0 0
  %617 = vmatprep.subr.bf16.mxu0 0
  %618 = vmatpush1.bf16.msra.mxu0 0
  %619 = vmatprep.subr.bf16.mxu0 0
  %620 = vmatpush1.bf16.msra.mxu0 0
  %621 = vmatprep.subr.bf16.mxu0 0
  %622 = vmatpush1.bf16.msra.mxu0 0
  %623 = vmatprep.subr.bf16.mxu0 0
  %624 = vmatpush1.bf16.msra.mxu0 0
  %625 = vmatprep.subr.bf16.mxu0 0
  %626 = vmatpush1.bf16.msra.mxu0 0
  %627 = vmatprep.subr.bf16.mxu0 0
  %628 = vmatpush1.bf16.msra.mxu0 0
  %629 = vmatprep.subr.bf16.mxu0 0
  %630 = vmatpush1.bf16.msra.mxu0 0
  %631 = vmatprep.subr.bf16.mxu0 0
  %632 = vmatpush1.bf16.msra.mxu0 0
  %633 = vmatprep.subr.bf16.mxu0 0
  %634 = vmatpush1.bf16.msra.mxu0 0
  %635 = vmatprep.subr.bf16.mxu0 0
  %636 = vmatpush1.bf16.msra.mxu0 0
  %637 = vmatprep.subr.bf16.mxu0 0
  %638 = vmatpush1.bf16.msra.mxu0 0
  %639 = vmatprep.subr.bf16.mxu0 0
  %640 = vmatpush1.bf16.msra.mxu0 0
  %641 = vmatprep.subr.bf16.mxu0 0
  %642 = vmatpush1.bf16.msra.mxu0 0
  %643 = vmatprep.subr.bf16.mxu0 0
  %644 = vmatpush1.bf16.msra.mxu0 0
  %645 = vmatprep.mubr.bf16.mxu0 0
  %646 = vmatmul.mubr.bf16.gmra.mrb[0].mxu0 %v608
  %v647 = vpop.f32.mrb[0].mxu0
  %v648 = vadd.f32 0.0, %v647
  %v649 = vpop.f32.mrb[0].mxu0
  %v650 = vpop.f32.mrb[0].mxu0
  %v651 = vpop.f32.mrb[0].mxu0
  %652 = vdwg.mxu0
  %653 = vrot.lane.b32.xlu0 %v198, 48
  %v654 = vpop.permute.xlu0 %653
  %v656 = vsel %vm298, %v604, 0
  %v659 = vsel %vm328, %v654, 0
  %661 = vmatprep.subr.bf16.mxu0 0
  %662 = vmatpush1.bf16.msra.mxu0 %v659
  %663 = vmatprep.subr.bf16.mxu0 0
  %664 = vmatpush1.bf16.msra.mxu0 0
  %665 = vmatprep.subr.bf16.mxu0 0
  %666 = vmatpush1.bf16.msra.mxu0 0
  %667 = vmatprep.subr.bf16.mxu0 0
  %668 = vmatpush1.bf16.msra.mxu0 0
  %669 = vmatprep.subr.bf16.mxu0 0
  %670 = vmatpush1.bf16.msra.mxu0 0
  %671 = vmatprep.subr.bf16.mxu0 0
  %672 = vmatpush1.bf16.msra.mxu0 0
  %673 = vmatprep.subr.bf16.mxu0 0
  %674 = vmatpush1.bf16.msra.mxu0 0
  %675 = vmatprep.subr.bf16.mxu0 0
  %676 = vmatpush1.bf16.msra.mxu0 0
  %677 = vmatprep.subr.bf16.mxu0 0
  %678 = vmatpush1.bf16.msra.mxu0 0
  %679 = vmatprep.subr.bf16.mxu0 0
  %680 = vmatpush1.bf16.msra.mxu0 0
  %681 = vmatprep.subr.bf16.mxu0 0
  %682 = vmatpush1.bf16.msra.mxu0 0
  %683 = vmatprep.subr.bf16.mxu0 0
  %684 = vmatpush1.bf16.msra.mxu0 0
  %685 = vmatprep.subr.bf16.mxu0 0
  %686 = vmatpush1.bf16.msra.mxu0 0
  %687 = vmatprep.subr.bf16.mxu0 0
  %688 = vmatpush1.bf16.msra.mxu0 0
  %689 = vmatprep.subr.bf16.mxu0 0
  %690 = vmatpush1.bf16.msra.mxu0 0
  %691 = vmatprep.subr.bf16.mxu0 0
  %692 = vmatpush1.bf16.msra.mxu0 0
  %693 = vmatprep.mubr.bf16.mxu0 0
  %694 = vmatmul.mubr.bf16.gmra.mrb[0].mxu0 %v656
  %v695 = vpop.f32.mrb[0].mxu0
  %v696 = vadd.f32 0.0, %v695
  %v697 = vpop.f32.mrb[0].mxu0
  %v698 = vpop.f32.mrb[0].mxu0
  %v699 = vpop.f32.mrb[0].mxu0
  %700 = vdwg.mxu0
  %v701 = vpack.c.bf16 %v696, %v648
  %s702 = scalar_lea.vmem %s6, 8
  %v703 = vld [vmem:[%s702] sm:$0xf]
  %v704 = vld [vmem:[%s702 + $0x4] sm:$0xf]
  %v707 = vunpack.c.l.b16 %v703
  %v708 = vunpack.c.l.b16 %v704
  %v709 = vpack.c.b16 %v708, %v707
  %v712 = vsel %vm202, %v701, 0
  %714 = vmatprep.subr.bf16.mxu0 0
  %715 = vmatpush1.bf16.msra.mxu0 %v709
  %716 = vmatprep.subr.bf16.mxu0 0
  %717 = vmatpush1.bf16.msra.mxu0 0
  %718 = vmatprep.subr.bf16.mxu0 0
  %719 = vmatpush1.bf16.msra.mxu0 0
  %720 = vmatprep.subr.bf16.mxu0 0
  %721 = vmatpush1.bf16.msra.mxu0 0
  %722 = vmatprep.subr.bf16.mxu0 0
  %723 = vmatpush1.bf16.msra.mxu0 0
  %724 = vmatprep.subr.bf16.mxu0 0
  %725 = vmatpush1.bf16.msra.mxu0 0
  %726 = vmatprep.subr.bf16.mxu0 0
  %727 = vmatpush1.bf16.msra.mxu0 0
  %728 = vmatprep.subr.bf16.mxu0 0
  %729 = vmatpush1.bf16.msra.mxu0 0
  %730 = vmatprep.subr.bf16.mxu0 0
  %731 = vmatpush1.bf16.msra.mxu0 0
  %732 = vmatprep.subr.bf16.mxu0 0
  %733 = vmatpush1.bf16.msra.mxu0 0
  %734 = vmatprep.subr.bf16.mxu0 0
  %735 = vmatpush1.bf16.msra.mxu0 0
  %736 = vmatprep.subr.bf16.mxu0 0
  %737 = vmatpush1.bf16.msra.mxu0 0
  %738 = vmatprep.subr.bf16.mxu0 0
  %739 = vmatpush1.bf16.msra.mxu0 0
  %740 = vmatprep.subr.bf16.mxu0 0
  %741 = vmatpush1.bf16.msra.mxu0 0
  %742 = vmatprep.subr.bf16.mxu0 0
  %743 = vmatpush1.bf16.msra.mxu0 0
  %744 = vmatprep.subr.bf16.mxu0 0
  %745 = vmatpush1.bf16.msra.mxu0 0
  %746 = vmatprep.mubr.bf16.mxu0 0
  %747 = vmatmul.mubr.bf16.gmra.mrb[0].mxu0 %v712
  %v748 = vpop.f32.mrb[0].mxu0
  %v749 = vadd.f32 0.0, %v748
  %v750 = vpop.f32.mrb[0].mxu0
  %v751 = vpop.f32.mrb[0].mxu0
  %v752 = vadd.f32 0.0, %v751
  %v753 = vpop.f32.mrb[0].mxu0
  %754 = vdwg.mxu0
  %v755 = vadd.f32 %v479, %v749
  %v756 = vadd.f32 %v480, %v752
  %v757 = vadd.f32 %v755, %v112
  %v758 = vadd.f32 %v756, %v113
  %v759 = vld [vmem:[%s8] sm:$0x1]
  %v760 = vld [vmem:[%s9] sm:$0x1]
  %v761 = vsel %vm70, %v757, 0.0
  %762 = vadd.xlane.f32.xlu0 %v761
  %v763 = vpop.xlane.xlu0 %762
  %v764 = vsel %vm70, %v758, 0.0
  %765 = vadd.xlane.f32.xlu0 %v764
  %v766 = vpop.xlane.xlu0 %765
  %v767 = vmul.f32 %v763, %v77
  %v768 = vmul.f32 %v766, %v77
  %v769 = vsub.f32 %v757, %v767
  %v770 = vsub.f32 %v758, %v768
  %v771 = vmul.f32 %v769, %v769
  %v772 = vmul.f32 %v770, %v770
  %v773 = vsel %vm70, %v771, 0.0
  %774 = vadd.xlane.f32.xlu0 %v773
  %v775 = vpop.xlane.xlu0 %774
  %v776 = vsel %vm70, %v772, 0.0
  %777 = vadd.xlane.f32.xlu0 %v776
  %v778 = vpop.xlane.xlu0 %777
  %v779 = vmul.f32 %v775, %v77
  %v780 = vmul.f32 %v778, %v77
  %v781 = vadd.f32 %v779, 1e-12
  %v782 = vadd.f32 %v780, 1e-12
  %v783 = vrsqrt.pop %v781
  %v784 = vrsqrt.pop %v782
  %v785 = vmul.f32 %v769, %v783
  %v786 = vmul.f32 %v770, %v784
  %v788 = vlaneseq
  %v789 = vshrl.u32 %v788, 7
  %v790 = vsub.s32 0, %v789
  %v791 = vrot.slane %v759, %v790
  %v793 = vmul.f32 %v785, %v791
  %v794 = vmul.f32 %v786, %v791
  %v796 = vlaneseq
  %v797 = vshrl.u32 %v796, 7
  %v798 = vsub.s32 0, %v797
  %v799 = vrot.slane %v760, %v798
  %v801 = vadd.f32 %v793, %v799
  %v802 = vadd.f32 %v794, %v799
  %v803 = vpack.c.bf16 %v802, %v801
  %v804 = vld [vmem:[%s10] sm:$0xf]
  %v805 = vld [vmem:[%s10 + $0x4] sm:$0xf]
  %v806 = vld [vmem:[%s10 + $0x8] sm:$0xf]
  %v807 = vld [vmem:[%s10 + $0xc] sm:$0xf]
  %v808 = vld [vmem:[%s11] sm:$0x1]
  %v810 = vlaneseq
  %v811 = vshrl.u32 %v810, 7
  %v812 = vsub.s32 0, %v811
  %v813 = vrot.slane %v808, %v812
  %v819 = vunpack.c.l.b16 %v804
  %v820 = vunpack.c.l.b16 %v805
  %v821 = vunpack.c.l.b16 %v806
  %v822 = vunpack.c.l.b16 %v807
  %v823 = vpack.c.b16 %v820, %v819
  %v824 = vpack.c.b16 %v822, %v821
  %v828 = vsel %vm70, %v803, 0
  %830 = vmatprep.subr.bf16.mxu0 0
  %831 = vmatpush1.bf16.msra.mxu0 %v823
  %832 = vmatprep.subr.bf16.mxu0 0
  %833 = vmatpush1.bf16.msra.mxu0 %v824
  %834 = vmatprep.subr.bf16.mxu0 0
  %835 = vmatpush1.bf16.msra.mxu0 0
  %836 = vmatprep.subr.bf16.mxu0 0
  %837 = vmatpush1.bf16.msra.mxu0 0
  %838 = vmatprep.subr.bf16.mxu0 0
  %839 = vmatpush1.bf16.msra.mxu0 0
  %840 = vmatprep.subr.bf16.mxu0 0
  %841 = vmatpush1.bf16.msra.mxu0 0
  %842 = vmatprep.subr.bf16.mxu0 0
  %843 = vmatpush1.bf16.msra.mxu0 0
  %844 = vmatprep.subr.bf16.mxu0 0
  %845 = vmatpush1.bf16.msra.mxu0 0
  %846 = vmatprep.subr.bf16.mxu0 0
  %847 = vmatpush1.bf16.msra.mxu0 0
  %848 = vmatprep.subr.bf16.mxu0 0
  %849 = vmatpush1.bf16.msra.mxu0 0
  %850 = vmatprep.subr.bf16.mxu0 0
  %851 = vmatpush1.bf16.msra.mxu0 0
  %852 = vmatprep.subr.bf16.mxu0 0
  %853 = vmatpush1.bf16.msra.mxu0 0
  %854 = vmatprep.subr.bf16.mxu0 0
  %855 = vmatpush1.bf16.msra.mxu0 0
  %856 = vmatprep.subr.bf16.mxu0 0
  %857 = vmatpush1.bf16.msra.mxu0 0
  %858 = vmatprep.subr.bf16.mxu0 0
  %859 = vmatpush1.bf16.msra.mxu0 0
  %860 = vmatprep.subr.bf16.mxu0 0
  %861 = vmatpush1.bf16.msra.mxu0 0
  %862 = vmatprep.mubr.bf16.mxu0 0
  %863 = vmatmul.mubr.bf16.gmra.mrb[0].mxu0 %v828
  %v864 = vpop.f32.mrb[0].mxu0
  %v865 = vadd.f32 %v813, %v864
  %v866 = vpop.f32.mrb[0].mxu0
  %v867 = vpop.f32.mrb[0].mxu0
  %v868 = vadd.f32 %v813, %v867
  %v869 = vpop.f32.mrb[0].mxu0
  %870 = vdwg.mxu0
  %v871 = vmul.f32 %v865, 0.5
  %v872 = vmul.f32 %v868, 0.5
  %v873 = vmul.f32 %v865, 0.044715
  %v874 = vmul.f32 %v868, 0.044715
  %v875 = vmul.f32 %v873, %v865
  %v876 = vmul.f32 %v874, %v868
  %v877 = vmul.f32 %v875, %v865
  %v878 = vmul.f32 %v876, %v868
  %v879 = vadd.f32 %v865, %v877
  %v880 = vadd.f32 %v868, %v878
  %v881 = vmul.f32 %v879, 0.7978846
  %v882 = vmul.f32 %v880, 0.7978846
  %v883 = vtanh.pop %v881
  %v884 = vtanh.pop %v882
  %v885 = vadd.f32 %v883, 1.0
  %v886 = vadd.f32 %v884, 1.0
  %v887 = vmul.f32 %v871, %v885
  %v888 = vmul.f32 %v872, %v886
  %v889 = vpack.c.bf16 %v888, %v887
  %v890 = vld [vmem:[%s12] sm:$0xf]
  %v891 = vld [vmem:[%s12 + $0x4] sm:$0xf]
  %v892 = vld [vmem:[%s12 + $0x8] sm:$0xf]
  %v893 = vld [vmem:[%s12 + $0xc] sm:$0xf]
  %v894 = vld [vmem:[%s12 + $0x10] sm:$0xf]
  %v895 = vld [vmem:[%s12 + $0x14] sm:$0xf]
  %v896 = vld [vmem:[%s12 + $0x18] sm:$0xf]
  %v897 = vld [vmem:[%s12 + $0x1c] sm:$0xf]
  %v898 = vld [vmem:[%s13] sm:$0x1]
  %v900 = vlaneseq
  %v901 = vshrl.u32 %v900, 7
  %v902 = vsub.s32 0, %v901
  %v903 = vrot.slane %v898, %v902
  %v913 = vunpack.c.l.b16 %v890
  %v914 = vunpack.c.l.b16 %v891
  %v915 = vunpack.c.l.b16 %v892
  %v916 = vunpack.c.l.b16 %v893
  %v917 = vunpack.c.l.b16 %v894
  %v918 = vunpack.c.l.b16 %v895
  %v919 = vunpack.c.l.b16 %v896
  %v920 = vunpack.c.l.b16 %v897
  %v921 = vpack.c.b16 %v914, %v913
  %v922 = vpack.c.b16 %v916, %v915
  %v923 = vpack.c.b16 %v918, %v917
  %v924 = vpack.c.b16 %v920, %v919
  %vm929 = vcmask 523264
  %v931 = vsel %vm929, %v889, 0
  %933 = vmatprep.subr.bf16.mxu0 0
  %934 = vmatpush1.bf16.msra.mxu0 %v921
  %935 = vmatprep.subr.bf16.mxu0 0
  %936 = vmatpush1.bf16.msra.mxu0 %v922
  %937 = vmatprep.subr.bf16.mxu0 0
  %938 = vmatpush1.bf16.msra.mxu0 %v923
  %939 = vmatprep.subr.bf16.mxu0 0
  %940 = vmatpush1.bf16.msra.mxu0 %v924
  %941 = vmatprep.subr.bf16.mxu0 0
  %942 = vmatpush1.bf16.msra.mxu0 0
  %943 = vmatprep.subr.bf16.mxu0 0
  %944 = vmatpush1.bf16.msra.mxu0 0
  %945 = vmatprep.subr.bf16.mxu0 0
  %946 = vmatpush1.bf16.msra.mxu0 0
  %947 = vmatprep.subr.bf16.mxu0 0
  %948 = vmatpush1.bf16.msra.mxu0 0
  %949 = vmatprep.subr.bf16.mxu0 0
  %950 = vmatpush1.bf16.msra.mxu0 0
  %951 = vmatprep.subr.bf16.mxu0 0
  %952 = vmatpush1.bf16.msra.mxu0 0
  %953 = vmatprep.subr.bf16.mxu0 0
  %954 = vmatpush1.bf16.msra.mxu0 0
  %955 = vmatprep.subr.bf16.mxu0 0
  %956 = vmatpush1.bf16.msra.mxu0 0
  %957 = vmatprep.subr.bf16.mxu0 0
  %958 = vmatpush1.bf16.msra.mxu0 0
  %959 = vmatprep.subr.bf16.mxu0 0
  %960 = vmatpush1.bf16.msra.mxu0 0
  %961 = vmatprep.subr.bf16.mxu0 0
  %962 = vmatpush1.bf16.msra.mxu0 0
  %963 = vmatprep.subr.bf16.mxu0 0
  %964 = vmatpush1.bf16.msra.mxu0 0
  %965 = vmatprep.mubr.bf16.mxu0 0
  %966 = vmatmul.mubr.bf16.gmra.mrb[0].mxu0 %v931
  %v967 = vpop.f32.mrb[0].mxu0
  %v968 = vadd.f32 %v903, %v967
  %v969 = vpop.f32.mrb[0].mxu0
  %v970 = vpop.f32.mrb[0].mxu0
  %v971 = vadd.f32 %v903, %v970
  %v972 = vpop.f32.mrb[0].mxu0
  %973 = vdwg.mxu0
  %v974 = vadd.f32 %v968, %v801
  %v975 = vadd.f32 %v971, %v802
  %v976 = vld [vmem:[%s14] sm:$0x1]
  %v977 = vld [vmem:[%s15] sm:$0x1]
  %v978 = vsel %vm70, %v974, 0.0
  %979 = vadd.xlane.f32.xlu0 %v978
  %v980 = vpop.xlane.xlu0 %979
  %v981 = vsel %vm70, %v975, 0.0
  %982 = vadd.xlane.f32.xlu0 %v981
  %v983 = vpop.xlane.xlu0 %982
  %v984 = vmul.f32 %v980, %v77
  %v985 = vmul.f32 %v983, %v77
  %v986 = vsub.f32 %v974, %v984
  %v987 = vsub.f32 %v975, %v985
  %v988 = vmul.f32 %v986, %v986
  %v989 = vmul.f32 %v987, %v987
  %v990 = vsel %vm70, %v988, 0.0
  %991 = vadd.xlane.f32.xlu0 %v990
  %v992 = vpop.xlane.xlu0 %991
  %v993 = vsel %vm70, %v989, 0.0
  %994 = vadd.xlane.f32.xlu0 %v993
  %v995 = vpop.xlane.xlu0 %994
  %v996 = vmul.f32 %v992, %v77
  %v997 = vmul.f32 %v995, %v77
  %v998 = vadd.f32 %v996, 1e-12
  %v999 = vadd.f32 %v997, 1e-12
  %v1000 = vrsqrt.pop %v998
  %v1001 = vrsqrt.pop %v999
  %v1002 = vmul.f32 %v986, %v1000
  %v1003 = vmul.f32 %v987, %v1001
  %v1005 = vlaneseq
  %v1006 = vshrl.u32 %v1005, 7
  %v1007 = vsub.s32 0, %v1006
  %v1008 = vrot.slane %v976, %v1007
  %v1010 = vmul.f32 %v1002, %v1008
  %v1011 = vmul.f32 %v1003, %v1008
  %v1013 = vlaneseq
  %v1014 = vshrl.u32 %v1013, 7
  %v1015 = vsub.s32 0, %v1014
  %v1016 = vrot.slane %v977, %v1015
  %v1018 = vadd.f32 %v1010, %v1016
  %v1019 = vadd.f32 %v1011, %v1016
  %v1020 = vpack.c.bf16 %v1019, %v1018
  %s1021 = scalar_lea.vmem %s4, 16
  %v1022 = vld [vmem:[%s1021] sm:$0xf]
  %v1023 = vld [vmem:[%s1021 + $0x4] sm:$0xf]
  %v1024 = vld [vmem:[%s1021 + $0x8] sm:$0xf]
  %v1025 = vld [vmem:[%s1021 + $0xc] sm:$0xf]
  %s1026 = scalar_lea.vmem %s5, 1
  %v1027 = vld [vmem:[%s1026] sm:$0x1]
  %v1029 = vlaneseq
  %v1030 = vshrl.u32 %v1029, 7
  %v1031 = vsub.s32 0, %v1030
  %v1032 = vrot.slane %v1027, %v1031
  %v1038 = vunpack.c.l.b16 %v1022
  %v1039 = vunpack.c.l.b16 %v1023
  %v1040 = vunpack.c.l.b16 %v1024
  %v1041 = vunpack.c.l.b16 %v1025
  %v1042 = vpack.c.b16 %v1039, %v1038
  %v1043 = vpack.c.b16 %v1041, %v1040
  %v1047 = vsel %vm70, %v1020, 0
  %1049 = vmatprep.subr.bf16.mxu0 0
  %1050 = vmatpush1.bf16.msra.mxu0 %v1042
  %1051 = vmatprep.subr.bf16.mxu0 0
  %1052 = vmatpush1.bf16.msra.mxu0 %v1043
  %1053 = vmatprep.subr.bf16.mxu0 0
  %1054 = vmatpush1.bf16.msra.mxu0 0
  %1055 = vmatprep.subr.bf16.mxu0 0
  %1056 = vmatpush1.bf16.msra.mxu0 0
  %1057 = vmatprep.subr.bf16.mxu0 0
  %1058 = vmatpush1.bf16.msra.mxu0 0
  %1059 = vmatprep.subr.bf16.mxu0 0
  %1060 = vmatpush1.bf16.msra.mxu0 0
  %1061 = vmatprep.subr.bf16.mxu0 0
  %1062 = vmatpush1.bf16.msra.mxu0 0
  %1063 = vmatprep.subr.bf16.mxu0 0
  %1064 = vmatpush1.bf16.msra.mxu0 0
  %1065 = vmatprep.subr.bf16.mxu0 0
  %1066 = vmatpush1.bf16.msra.mxu0 0
  %1067 = vmatprep.subr.bf16.mxu0 0
  %1068 = vmatpush1.bf16.msra.mxu0 0
  %1069 = vmatprep.subr.bf16.mxu0 0
  %1070 = vmatpush1.bf16.msra.mxu0 0
  %1071 = vmatprep.subr.bf16.mxu0 0
  %1072 = vmatpush1.bf16.msra.mxu0 0
  %1073 = vmatprep.subr.bf16.mxu0 0
  %1074 = vmatpush1.bf16.msra.mxu0 0
  %1075 = vmatprep.subr.bf16.mxu0 0
  %1076 = vmatpush1.bf16.msra.mxu0 0
  %1077 = vmatprep.subr.bf16.mxu0 0
  %1078 = vmatpush1.bf16.msra.mxu0 0
  %1079 = vmatprep.subr.bf16.mxu0 0
  %1080 = vmatpush1.bf16.msra.mxu0 0
  %1081 = vmatprep.mubr.bf16.mxu0 0
  %1082 = vmatmul.mubr.bf16.gmra.mrb[0].mxu0 %v1047
  %v1083 = vpop.f32.mrb[0].mxu0
  %v1084 = vadd.f32 %v1032, %v1083
  %v1085 = vpop.f32.mrb[0].mxu0
  %v1086 = vpop.f32.mrb[0].mxu0
  %v1087 = vadd.f32 %v1032, %v1086
  %v1088 = vpop.f32.mrb[0].mxu0
  %1089 = vdwg.mxu0
  %s1090 = scalar_lea.vmem %s7, 1
  %v1091 = vld [vmem:[%s1090] sm:$0x1]
  %v1092 = vpack.c.bf16 %v1084, %v1084
  %v1093 = vpack.c.bf16 %v1087, %v1087
  %1095 = vrot.lane.b32.xlu0 %v1092, 96
  %v1096 = vpop.permute.xlu0 %1095
  %v1098 = vsel %vm202, %v1092, 0
  %v1101 = vsel %vm202, %v1096, 0
  %1103 = vmatprep.subr.bf16.mxu0 0
  %1104 = vmatpush1.bf16.xpose.msra.mxu0 %v1101
  %1105 = vmatprep.subr.bf16.mxu0 0
  %1106 = vmatpush1.bf16.xpose.msra.mxu0 0
  %1107 = vmatprep.subr.bf16.mxu0 0
  %1108 = vmatpush1.bf16.xpose.msra.mxu0 0
  %1109 = vmatprep.subr.bf16.mxu0 0
  %1110 = vmatpush1.bf16.xpose.msra.mxu0 0
  %1111 = vmatprep.subr.bf16.mxu0 0
  %1112 = vmatpush1.bf16.xpose.msra.mxu0 0
  %1113 = vmatprep.subr.bf16.mxu0 0
  %1114 = vmatpush1.bf16.xpose.msra.mxu0 0
  %1115 = vmatprep.subr.bf16.mxu0 0
  %1116 = vmatpush1.bf16.xpose.msra.mxu0 0
  %1117 = vmatprep.subr.bf16.mxu0 0
  %1118 = vmatpush1.bf16.xpose.msra.mxu0 0
  %1119 = vmatprep.subr.bf16.mxu0 0
  %1120 = vmatpush1.bf16.xpose.msra.mxu0 0
  %1121 = vmatprep.subr.bf16.mxu0 0
  %1122 = vmatpush1.bf16.xpose.msra.mxu0 0
  %1123 = vmatprep.subr.bf16.mxu0 0
  %1124 = vmatpush1.bf16.xpose.msra.mxu0 0
  %1125 = vmatprep.subr.bf16.mxu0 0
  %1126 = vmatpush1.bf16.xpose.msra.mxu0 0
  %1127 = vmatprep.subr.bf16.mxu0 0
  %1128 = vmatpush1.bf16.xpose.msra.mxu0 0
  %1129 = vmatprep.subr.bf16.mxu0 0
  %1130 = vmatpush1.bf16.xpose.msra.mxu0 0
  %1131 = vmatprep.subr.bf16.mxu0 0
  %1132 = vmatpush1.bf16.xpose.msra.mxu0 0
  %1133 = vmatprep.subr.bf16.mxu0 0
  %1134 = vmatpush1.bf16.xpose.msra.mxu0 0
  %1135 = vmatprep.mubr.bf16.mxu0 0
  %1136 = vmatmul.mubr.bf16.gmra.mrb[0].mxu0 %v1098
  %v1137 = vpop.f32.mrb[0].mxu0
  %v1138 = vadd.f32 %v121, %v1137
  %v1139 = vpop.f32.mrb[0].mxu0
  %v1140 = vpop.f32.mrb[0].mxu0
  %v1141 = vpop.f32.mrb[0].mxu0
  %1142 = vdwg.mxu0
  %1144 = vrot.lane.b32.xlu0 %v1093, 96
  %v1145 = vpop.permute.xlu0 %1144
  %v1147 = vsel %vm202, %v1093, 0
  %v1150 = vsel %vm202, %v1145, 0
  %1152 = vmatprep.subr.bf16.mxu0 0
  %1153 = vmatpush1.bf16.xpose.msra.mxu0 %v1150
  %1154 = vmatprep.subr.bf16.mxu0 0
  %1155 = vmatpush1.bf16.xpose.msra.mxu0 0
  %1156 = vmatprep.subr.bf16.mxu0 0
  %1157 = vmatpush1.bf16.xpose.msra.mxu0 0
  %1158 = vmatprep.subr.bf16.mxu0 0
  %1159 = vmatpush1.bf16.xpose.msra.mxu0 0
  %1160 = vmatprep.subr.bf16.mxu0 0
  %1161 = vmatpush1.bf16.xpose.msra.mxu0 0
  %1162 = vmatprep.subr.bf16.mxu0 0
  %1163 = vmatpush1.bf16.xpose.msra.mxu0 0
  %1164 = vmatprep.subr.bf16.mxu0 0
  %1165 = vmatpush1.bf16.xpose.msra.mxu0 0
  %1166 = vmatprep.subr.bf16.mxu0 0
  %1167 = vmatpush1.bf16.xpose.msra.mxu0 0
  %1168 = vmatprep.subr.bf16.mxu0 0
  %1169 = vmatpush1.bf16.xpose.msra.mxu0 0
  %1170 = vmatprep.subr.bf16.mxu0 0
  %1171 = vmatpush1.bf16.xpose.msra.mxu0 0
  %1172 = vmatprep.subr.bf16.mxu0 0
  %1173 = vmatpush1.bf16.xpose.msra.mxu0 0
  %1174 = vmatprep.subr.bf16.mxu0 0
  %1175 = vmatpush1.bf16.xpose.msra.mxu0 0
  %1176 = vmatprep.subr.bf16.mxu0 0
  %1177 = vmatpush1.bf16.xpose.msra.mxu0 0
  %1178 = vmatprep.subr.bf16.mxu0 0
  %1179 = vmatpush1.bf16.xpose.msra.mxu0 0
  %1180 = vmatprep.subr.bf16.mxu0 0
  %1181 = vmatpush1.bf16.xpose.msra.mxu0 0
  %1182 = vmatprep.subr.bf16.mxu0 0
  %1183 = vmatpush1.bf16.xpose.msra.mxu0 0
  %1184 = vmatprep.mubr.bf16.mxu0 0
  %1185 = vmatmul.mubr.bf16.gmra.mrb[0].mxu0 %v1147
  %v1186 = vpop.f32.mrb[0].mxu0
  %v1187 = vadd.f32 %v125, %v1186
  %v1188 = vpop.f32.mrb[0].mxu0
  %v1189 = vpop.f32.mrb[0].mxu0
  %v1190 = vpop.f32.mrb[0].mxu0
  %1191 = vdwg.mxu0
  %v1192 = vsel %vm298, %v1138, -inf
  %1193 = vmax.xlane.f32.xlu0 %v1192
  %v1194 = vpop.xlane.xlu0 %1193
  %v1195 = vsel %vm298, %v1187, -inf
  %1196 = vmax.xlane.f32.xlu0 %v1195
  %v1197 = vpop.xlane.xlu0 %1196
  %v1198 = vsub.f32 %v1138, %v1194
  %v1199 = vsub.f32 %v1187, %v1197
  %v1200 = vmul.f32 %v1198, 1.442695
  %v1201 = vpow.pop %v1200
  %v1202 = vmul.f32 %v1199, 1.442695
  %v1203 = vpow.pop %v1202
  %v1204 = vsel %vm298, %v1201, 0.0
  %1205 = vadd.xlane.f32.xlu0 %v1204
  %v1206 = vpop.xlane.xlu0 %1205
  %v1207 = vsel %vm298, %v1203, 0.0
  %1208 = vadd.xlane.f32.xlu0 %v1207
  %v1209 = vpop.xlane.xlu0 %1208
  %v1210 = vrcp.pop %v1206
  %v1211 = vrcp.pop %v1209
  %v1212 = vmul.f32 %v1201, %v1210
  %v1213 = vmul.f32 %v1203, %v1211
  %v1214 = vpack.c.bf16 %v1212, %v1212
  %v1215 = vpack.c.bf16 %v1213, %v1213
  %1216 = vrot.lane.b32.xlu0 %v1092, 64
  %v1217 = vpop.permute.xlu0 %1216
  %v1219 = vsel %vm298, %v1214, 0
  %v1222 = vsel %vm328, %v1217, 0
  %1224 = vmatprep.subr.bf16.mxu0 0
  %1225 = vmatpush1.bf16.msra.mxu0 %v1222
  %1226 = vmatprep.subr.bf16.mxu0 0
  %1227 = vmatpush1.bf16.msra.mxu0 0
  %1228 = vmatprep.subr.bf16.mxu0 0
  %1229 = vmatpush1.bf16.msra.mxu0 0
  %1230 = vmatprep.subr.bf16.mxu0 0
  %1231 = vmatpush1.bf16.msra.mxu0 0
  %1232 = vmatprep.subr.bf16.mxu0 0
  %1233 = vmatpush1.bf16.msra.mxu0 0
  %1234 = vmatprep.subr.bf16.mxu0 0
  %1235 = vmatpush1.bf16.msra.mxu0 0
  %1236 = vmatprep.subr.bf16.mxu0 0
  %1237 = vmatpush1.bf16.msra.mxu0 0
  %1238 = vmatprep.subr.bf16.mxu0 0
  %1239 = vmatpush1.bf16.msra.mxu0 0
  %1240 = vmatprep.subr.bf16.mxu0 0
  %1241 = vmatpush1.bf16.msra.mxu0 0
  %1242 = vmatprep.subr.bf16.mxu0 0
  %1243 = vmatpush1.bf16.msra.mxu0 0
  %1244 = vmatprep.subr.bf16.mxu0 0
  %1245 = vmatpush1.bf16.msra.mxu0 0
  %1246 = vmatprep.subr.bf16.mxu0 0
  %1247 = vmatpush1.bf16.msra.mxu0 0
  %1248 = vmatprep.subr.bf16.mxu0 0
  %1249 = vmatpush1.bf16.msra.mxu0 0
  %1250 = vmatprep.subr.bf16.mxu0 0
  %1251 = vmatpush1.bf16.msra.mxu0 0
  %1252 = vmatprep.subr.bf16.mxu0 0
  %1253 = vmatpush1.bf16.msra.mxu0 0
  %1254 = vmatprep.subr.bf16.mxu0 0
  %1255 = vmatpush1.bf16.msra.mxu0 0
  %1256 = vmatprep.mubr.bf16.mxu0 0
  %1257 = vmatmul.mubr.bf16.gmra.mrb[0].mxu0 %v1219
  %v1258 = vpop.f32.mrb[0].mxu0
  %v1259 = vadd.f32 0.0, %v1258
  %v1260 = vpop.f32.mrb[0].mxu0
  %v1261 = vpop.f32.mrb[0].mxu0
  %v1262 = vpop.f32.mrb[0].mxu0
  %1263 = vdwg.mxu0
  %1264 = vrot.lane.b32.xlu0 %v1093, 64
  %v1265 = vpop.permute.xlu0 %1264
  %v1267 = vsel %vm298, %v1215, 0
  %v1270 = vsel %vm328, %v1265, 0
  %1272 = vmatprep.subr.bf16.mxu0 0
  %1273 = vmatpush1.bf16.msra.mxu0 %v1270
  %1274 = vmatprep.subr.bf16.mxu0 0
  %1275 = vmatpush1.bf16.msra.mxu0 0
  %1276 = vmatprep.subr.bf16.mxu0 0
  %1277 = vmatpush1.bf16.msra.mxu0 0
  %1278 = vmatprep.subr.bf16.mxu0 0
  %1279 = vmatpush1.bf16.msra.mxu0 0
  %1280 = vmatprep.subr.bf16.mxu0 0
  %1281 = vmatpush1.bf16.msra.mxu0 0
  %1282 = vmatprep.subr.bf16.mxu0 0
  %1283 = vmatpush1.bf16.msra.mxu0 0
  %1284 = vmatprep.subr.bf16.mxu0 0
  %1285 = vmatpush1.bf16.msra.mxu0 0
  %1286 = vmatprep.subr.bf16.mxu0 0
  %1287 = vmatpush1.bf16.msra.mxu0 0
  %1288 = vmatprep.subr.bf16.mxu0 0
  %1289 = vmatpush1.bf16.msra.mxu0 0
  %1290 = vmatprep.subr.bf16.mxu0 0
  %1291 = vmatpush1.bf16.msra.mxu0 0
  %1292 = vmatprep.subr.bf16.mxu0 0
  %1293 = vmatpush1.bf16.msra.mxu0 0
  %1294 = vmatprep.subr.bf16.mxu0 0
  %1295 = vmatpush1.bf16.msra.mxu0 0
  %1296 = vmatprep.subr.bf16.mxu0 0
  %1297 = vmatpush1.bf16.msra.mxu0 0
  %1298 = vmatprep.subr.bf16.mxu0 0
  %1299 = vmatpush1.bf16.msra.mxu0 0
  %1300 = vmatprep.subr.bf16.mxu0 0
  %1301 = vmatpush1.bf16.msra.mxu0 0
  %1302 = vmatprep.subr.bf16.mxu0 0
  %1303 = vmatpush1.bf16.msra.mxu0 0
  %1304 = vmatprep.mubr.bf16.mxu0 0
  %1305 = vmatmul.mubr.bf16.gmra.mrb[0].mxu0 %v1267
  %v1306 = vpop.f32.mrb[0].mxu0
  %v1307 = vadd.f32 0.0, %v1306
  %v1308 = vpop.f32.mrb[0].mxu0
  %v1309 = vpop.f32.mrb[0].mxu0
  %v1310 = vpop.f32.mrb[0].mxu0
  %1311 = vdwg.mxu0
  %v1312 = vpack.c.bf16 %v1307, %v1259
  %s1313 = scalar_lea.vmem %s6, 16
  %v1314 = vld [vmem:[%s1313] sm:$0xf]
  %v1315 = vld [vmem:[%s1313 + $0x4] sm:$0xf]
  %v1318 = vunpack.c.l.b16 %v1314
  %v1319 = vunpack.c.l.b16 %v1315
  %v1320 = vpack.c.b16 %v1319, %v1318
  %v1323 = vsel %vm202, %v1312, 0
  %1325 = vmatprep.subr.bf16.mxu0 0
  %1326 = vmatpush1.bf16.msra.mxu0 %v1320
  %1327 = vmatprep.subr.bf16.mxu0 0
  %1328 = vmatpush1.bf16.msra.mxu0 0
  %1329 = vmatprep.subr.bf16.mxu0 0
  %1330 = vmatpush1.bf16.msra.mxu0 0
  %1331 = vmatprep.subr.bf16.mxu0 0
  %1332 = vmatpush1.bf16.msra.mxu0 0
  %1333 = vmatprep.subr.bf16.mxu0 0
  %1334 = vmatpush1.bf16.msra.mxu0 0
  %1335 = vmatprep.subr.bf16.mxu0 0
  %1336 = vmatpush1.bf16.msra.mxu0 0
  %1337 = vmatprep.subr.bf16.mxu0 0
  %1338 = vmatpush1.bf16.msra.mxu0 0
  %1339 = vmatprep.subr.bf16.mxu0 0
  %1340 = vmatpush1.bf16.msra.mxu0 0
  %1341 = vmatprep.subr.bf16.mxu0 0
  %1342 = vmatpush1.bf16.msra.mxu0 0
  %1343 = vmatprep.subr.bf16.mxu0 0
  %1344 = vmatpush1.bf16.msra.mxu0 0
  %1345 = vmatprep.subr.bf16.mxu0 0
  %1346 = vmatpush1.bf16.msra.mxu0 0
  %1347 = vmatprep.subr.bf16.mxu0 0
  %1348 = vmatpush1.bf16.msra.mxu0 0
  %1349 = vmatprep.subr.bf16.mxu0 0
  %1350 = vmatpush1.bf16.msra.mxu0 0
  %1351 = vmatprep.subr.bf16.mxu0 0
  %1352 = vmatpush1.bf16.msra.mxu0 0
  %1353 = vmatprep.subr.bf16.mxu0 0
  %1354 = vmatpush1.bf16.msra.mxu0 0
  %1355 = vmatprep.subr.bf16.mxu0 0
  %1356 = vmatpush1.bf16.msra.mxu0 0
  %1357 = vmatprep.mubr.bf16.mxu0 0
  %1358 = vmatmul.mubr.bf16.gmra.mrb[0].mxu0 %v1323
  %v1359 = vpop.f32.mrb[0].mxu0
  %v1360 = vadd.f32 0.0, %v1359
  %v1361 = vpop.f32.mrb[0].mxu0
  %v1362 = vpop.f32.mrb[0].mxu0
  %v1363 = vadd.f32 0.0, %v1362
  %v1364 = vpop.f32.mrb[0].mxu0
  %1365 = vdwg.mxu0
  %v1367 = vlaneseq
  %v1368 = vshrl.u32 %v1367, 7
  %v1369 = vsub.s32 0, %v1368
  %v1370 = vrot.slane %v1091, %v1369
  %v1372 = vadd.f32 %v1370, %v1360
  %v1373 = vadd.f32 %v1370, %v1363
  %1374 = vrot.lane.b32.xlu0 %v1092, 112
  %v1375 = vpop.permute.xlu0 %1374
  %1376 = vrot.lane.b32.xlu0 %v1092, 80
  %v1377 = vpop.permute.xlu0 %1376
  %v1379 = vsel %vm202, %v1375, 0
  %v1382 = vsel %vm202, %v1377, 0
  %1384 = vmatprep.subr.bf16.mxu0 0
  %1385 = vmatpush1.bf16.xpose.msra.mxu0 %v1382
  %1386 = vmatprep.subr.bf16.mxu0 0
  %1387 = vmatpush1.bf16.xpose.msra.mxu0 0
  %1388 = vmatprep.subr.bf16.mxu0 0
  %1389 = vmatpush1.bf16.xpose.msra.mxu0 0
  %1390 = vmatprep.subr.bf16.mxu0 0
  %1391 = vmatpush1.bf16.xpose.msra.mxu0 0
  %1392 = vmatprep.subr.bf16.mxu0 0
  %1393 = vmatpush1.bf16.xpose.msra.mxu0 0
  %1394 = vmatprep.subr.bf16.mxu0 0
  %1395 = vmatpush1.bf16.xpose.msra.mxu0 0
  %1396 = vmatprep.subr.bf16.mxu0 0
  %1397 = vmatpush1.bf16.xpose.msra.mxu0 0
  %1398 = vmatprep.subr.bf16.mxu0 0
  %1399 = vmatpush1.bf16.xpose.msra.mxu0 0
  %1400 = vmatprep.subr.bf16.mxu0 0
  %1401 = vmatpush1.bf16.xpose.msra.mxu0 0
  %1402 = vmatprep.subr.bf16.mxu0 0
  %1403 = vmatpush1.bf16.xpose.msra.mxu0 0
  %1404 = vmatprep.subr.bf16.mxu0 0
  %1405 = vmatpush1.bf16.xpose.msra.mxu0 0
  %1406 = vmatprep.subr.bf16.mxu0 0
  %1407 = vmatpush1.bf16.xpose.msra.mxu0 0
  %1408 = vmatprep.subr.bf16.mxu0 0
  %1409 = vmatpush1.bf16.xpose.msra.mxu0 0
  %1410 = vmatprep.subr.bf16.mxu0 0
  %1411 = vmatpush1.bf16.xpose.msra.mxu0 0
  %1412 = vmatprep.subr.bf16.mxu0 0
  %1413 = vmatpush1.bf16.xpose.msra.mxu0 0
  %1414 = vmatprep.subr.bf16.mxu0 0
  %1415 = vmatpush1.bf16.xpose.msra.mxu0 0
  %1416 = vmatprep.mubr.bf16.mxu0 0
  %1417 = vmatmul.mubr.bf16.gmra.mrb[0].mxu0 %v1379
  %v1418 = vpop.f32.mrb[0].mxu0
  %v1419 = vadd.f32 %v121, %v1418
  %v1420 = vpop.f32.mrb[0].mxu0
  %v1421 = vpop.f32.mrb[0].mxu0
  %v1422 = vpop.f32.mrb[0].mxu0
  %1423 = vdwg.mxu0
  %1424 = vrot.lane.b32.xlu0 %v1093, 112
  %v1425 = vpop.permute.xlu0 %1424
  %1426 = vrot.lane.b32.xlu0 %v1093, 80
  %v1427 = vpop.permute.xlu0 %1426
  %v1429 = vsel %vm202, %v1425, 0
  %v1432 = vsel %vm202, %v1427, 0
  %1434 = vmatprep.subr.bf16.mxu0 0
  %1435 = vmatpush1.bf16.xpose.msra.mxu0 %v1432
  %1436 = vmatprep.subr.bf16.mxu0 0
  %1437 = vmatpush1.bf16.xpose.msra.mxu0 0
  %1438 = vmatprep.subr.bf16.mxu0 0
  %1439 = vmatpush1.bf16.xpose.msra.mxu0 0
  %1440 = vmatprep.subr.bf16.mxu0 0
  %1441 = vmatpush1.bf16.xpose.msra.mxu0 0
  %1442 = vmatprep.subr.bf16.mxu0 0
  %1443 = vmatpush1.bf16.xpose.msra.mxu0 0
  %1444 = vmatprep.subr.bf16.mxu0 0
  %1445 = vmatpush1.bf16.xpose.msra.mxu0 0
  %1446 = vmatprep.subr.bf16.mxu0 0
  %1447 = vmatpush1.bf16.xpose.msra.mxu0 0
  %1448 = vmatprep.subr.bf16.mxu0 0
  %1449 = vmatpush1.bf16.xpose.msra.mxu0 0
  %1450 = vmatprep.subr.bf16.mxu0 0
  %1451 = vmatpush1.bf16.xpose.msra.mxu0 0
  %1452 = vmatprep.subr.bf16.mxu0 0
  %1453 = vmatpush1.bf16.xpose.msra.mxu0 0
  %1454 = vmatprep.subr.bf16.mxu0 0
  %1455 = vmatpush1.bf16.xpose.msra.mxu0 0
  %1456 = vmatprep.subr.bf16.mxu0 0
  %1457 = vmatpush1.bf16.xpose.msra.mxu0 0
  %1458 = vmatprep.subr.bf16.mxu0 0
  %1459 = vmatpush1.bf16.xpose.msra.mxu0 0
  %1460 = vmatprep.subr.bf16.mxu0 0
  %1461 = vmatpush1.bf16.xpose.msra.mxu0 0
  %1462 = vmatprep.subr.bf16.mxu0 0
  %1463 = vmatpush1.bf16.xpose.msra.mxu0 0
  %1464 = vmatprep.subr.bf16.mxu0 0
  %1465 = vmatpush1.bf16.xpose.msra.mxu0 0
  %1466 = vmatprep.mubr.bf16.mxu0 0
  %1467 = vmatmul.mubr.bf16.gmra.mrb[0].mxu0 %v1429
  %v1468 = vpop.f32.mrb[0].mxu0
  %v1469 = vadd.f32 %v125, %v1468
  %v1470 = vpop.f32.mrb[0].mxu0
  %v1471 = vpop.f32.mrb[0].mxu0
  %v1472 = vpop.f32.mrb[0].mxu0
  %1473 = vdwg.mxu0
  %v1474 = vsel %vm298, %v1419, -inf
  %1475 = vmax.xlane.f32.xlu0 %v1474
  %v1476 = vpop.xlane.xlu0 %1475
  %v1477 = vsel %vm298, %v1469, -inf
  %1478 = vmax.xlane.f32.xlu0 %v1477
  %v1479 = vpop.xlane.xlu0 %1478
  %v1480 = vsub.f32 %v1419, %v1476
  %v1481 = vsub.f32 %v1469, %v1479
  %v1482 = vmul.f32 %v1480, 1.442695
  %v1483 = vpow.pop %v1482
  %v1484 = vmul.f32 %v1481, 1.442695
  %v1485 = vpow.pop %v1484
  %v1486 = vsel %vm298, %v1483, 0.0
  %1487 = vadd.xlane.f32.xlu0 %v1486
  %v1488 = vpop.xlane.xlu0 %1487
  %v1489 = vsel %vm298, %v1485, 0.0
  %1490 = vadd.xlane.f32.xlu0 %v1489
  %v1491 = vpop.xlane.xlu0 %1490
  %v1492 = vrcp.pop %v1488
  %v1493 = vrcp.pop %v1491
  %v1494 = vmul.f32 %v1483, %v1492
  %v1495 = vmul.f32 %v1485, %v1493
  %v1496 = vpack.c.bf16 %v1494, %v1494
  %v1497 = vpack.c.bf16 %v1495, %v1495
  %1498 = vrot.lane.b32.xlu0 %v1092, 48
  %v1499 = vpop.permute.xlu0 %1498
  %v1501 = vsel %vm298, %v1496, 0
  %v1504 = vsel %vm328, %v1499, 0
  %1506 = vmatprep.subr.bf16.mxu0 0
  %1507 = vmatpush1.bf16.msra.mxu0 %v1504
  %1508 = vmatprep.subr.bf16.mxu0 0
  %1509 = vmatpush1.bf16.msra.mxu0 0
  %1510 = vmatprep.subr.bf16.mxu0 0
  %1511 = vmatpush1.bf16.msra.mxu0 0
  %1512 = vmatprep.subr.bf16.mxu0 0
  %1513 = vmatpush1.bf16.msra.mxu0 0
  %1514 = vmatprep.subr.bf16.mxu0 0
  %1515 = vmatpush1.bf16.msra.mxu0 0
  %1516 = vmatprep.subr.bf16.mxu0 0
  %1517 = vmatpush1.bf16.msra.mxu0 0
  %1518 = vmatprep.subr.bf16.mxu0 0
  %1519 = vmatpush1.bf16.msra.mxu0 0
  %1520 = vmatprep.subr.bf16.mxu0 0
  %1521 = vmatpush1.bf16.msra.mxu0 0
  %1522 = vmatprep.subr.bf16.mxu0 0
  %1523 = vmatpush1.bf16.msra.mxu0 0
  %1524 = vmatprep.subr.bf16.mxu0 0
  %1525 = vmatpush1.bf16.msra.mxu0 0
  %1526 = vmatprep.subr.bf16.mxu0 0
  %1527 = vmatpush1.bf16.msra.mxu0 0
  %1528 = vmatprep.subr.bf16.mxu0 0
  %1529 = vmatpush1.bf16.msra.mxu0 0
  %1530 = vmatprep.subr.bf16.mxu0 0
  %1531 = vmatpush1.bf16.msra.mxu0 0
  %1532 = vmatprep.subr.bf16.mxu0 0
  %1533 = vmatpush1.bf16.msra.mxu0 0
  %1534 = vmatprep.subr.bf16.mxu0 0
  %1535 = vmatpush1.bf16.msra.mxu0 0
  %1536 = vmatprep.subr.bf16.mxu0 0
  %1537 = vmatpush1.bf16.msra.mxu0 0
  %1538 = vmatprep.mubr.bf16.mxu0 0
  %1539 = vmatmul.mubr.bf16.gmra.mrb[0].mxu0 %v1501
  %v1540 = vpop.f32.mrb[0].mxu0
  %v1541 = vadd.f32 0.0, %v1540
  %v1542 = vpop.f32.mrb[0].mxu0
  %v1543 = vpop.f32.mrb[0].mxu0
  %v1544 = vpop.f32.mrb[0].mxu0
  %1545 = vdwg.mxu0
  %1546 = vrot.lane.b32.xlu0 %v1093, 48
  %v1547 = vpop.permute.xlu0 %1546
  %v1549 = vsel %vm298, %v1497, 0
  %v1552 = vsel %vm328, %v1547, 0
  %1554 = vmatprep.subr.bf16.mxu0 0
  %1555 = vmatpush1.bf16.msra.mxu0 %v1552
  %1556 = vmatprep.subr.bf16.mxu0 0
  %1557 = vmatpush1.bf16.msra.mxu0 0
  %1558 = vmatprep.subr.bf16.mxu0 0
  %1559 = vmatpush1.bf16.msra.mxu0 0
  %1560 = vmatprep.subr.bf16.mxu0 0
  %1561 = vmatpush1.bf16.msra.mxu0 0
  %1562 = vmatprep.subr.bf16.mxu0 0
  %1563 = vmatpush1.bf16.msra.mxu0 0
  %1564 = vmatprep.subr.bf16.mxu0 0
  %1565 = vmatpush1.bf16.msra.mxu0 0
  %1566 = vmatprep.subr.bf16.mxu0 0
  %1567 = vmatpush1.bf16.msra.mxu0 0
  %1568 = vmatprep.subr.bf16.mxu0 0
  %1569 = vmatpush1.bf16.msra.mxu0 0
  %1570 = vmatprep.subr.bf16.mxu0 0
  %1571 = vmatpush1.bf16.msra.mxu0 0
  %1572 = vmatprep.subr.bf16.mxu0 0
  %1573 = vmatpush1.bf16.msra.mxu0 0
  %1574 = vmatprep.subr.bf16.mxu0 0
  %1575 = vmatpush1.bf16.msra.mxu0 0
  %1576 = vmatprep.subr.bf16.mxu0 0
  %1577 = vmatpush1.bf16.msra.mxu0 0
  %1578 = vmatprep.subr.bf16.mxu0 0
  %1579 = vmatpush1.bf16.msra.mxu0 0
  %1580 = vmatprep.subr.bf16.mxu0 0
  %1581 = vmatpush1.bf16.msra.mxu0 0
  %1582 = vmatprep.subr.bf16.mxu0 0
  %1583 = vmatpush1.bf16.msra.mxu0 0
  %1584 = vmatprep.subr.bf16.mxu0 0
  %1585 = vmatpush1.bf16.msra.mxu0 0
  %1586 = vmatprep.mubr.bf16.mxu0 0
  %1587 = vmatmul.mubr.bf16.gmra.mrb[0].mxu0 %v1549
  %v1588 = vpop.f32.mrb[0].mxu0
  %v1589 = vadd.f32 0.0, %v1588
  %v1590 = vpop.f32.mrb[0].mxu0
  %v1591 = vpop.f32.mrb[0].mxu0
  %v1592 = vpop.f32.mrb[0].mxu0
  %1593 = vdwg.mxu0
  %v1594 = vpack.c.bf16 %v1589, %v1541
  %s1595 = scalar_lea.vmem %s6, 24
  %v1596 = vld [vmem:[%s1595] sm:$0xf]
  %v1597 = vld [vmem:[%s1595 + $0x4] sm:$0xf]
  %v1600 = vunpack.c.l.b16 %v1596
  %v1601 = vunpack.c.l.b16 %v1597
  %v1602 = vpack.c.b16 %v1601, %v1600
  %v1605 = vsel %vm202, %v1594, 0
  %1607 = vmatprep.subr.bf16.mxu0 0
  %1608 = vmatpush1.bf16.msra.mxu0 %v1602
  %1609 = vmatprep.subr.bf16.mxu0 0
  %1610 = vmatpush1.bf16.msra.mxu0 0
  %1611 = vmatprep.subr.bf16.mxu0 0
  %1612 = vmatpush1.bf16.msra.mxu0 0
  %1613 = vmatprep.subr.bf16.mxu0 0
  %1614 = vmatpush1.bf16.msra.mxu0 0
  %1615 = vmatprep.subr.bf16.mxu0 0
  %1616 = vmatpush1.bf16.msra.mxu0 0
  %1617 = vmatprep.subr.bf16.mxu0 0
  %1618 = vmatpush1.bf16.msra.mxu0 0
  %1619 = vmatprep.subr.bf16.mxu0 0
  %1620 = vmatpush1.bf16.msra.mxu0 0
  %1621 = vmatprep.subr.bf16.mxu0 0
  %1622 = vmatpush1.bf16.msra.mxu0 0
  %1623 = vmatprep.subr.bf16.mxu0 0
  %1624 = vmatpush1.bf16.msra.mxu0 0
  %1625 = vmatprep.subr.bf16.mxu0 0
  %1626 = vmatpush1.bf16.msra.mxu0 0
  %1627 = vmatprep.subr.bf16.mxu0 0
  %1628 = vmatpush1.bf16.msra.mxu0 0
  %1629 = vmatprep.subr.bf16.mxu0 0
  %1630 = vmatpush1.bf16.msra.mxu0 0
  %1631 = vmatprep.subr.bf16.mxu0 0
  %1632 = vmatpush1.bf16.msra.mxu0 0
  %1633 = vmatprep.subr.bf16.mxu0 0
  %1634 = vmatpush1.bf16.msra.mxu0 0
  %1635 = vmatprep.subr.bf16.mxu0 0
  %1636 = vmatpush1.bf16.msra.mxu0 0
  %1637 = vmatprep.subr.bf16.mxu0 0
  %1638 = vmatpush1.bf16.msra.mxu0 0
  %1639 = vmatprep.mubr.bf16.mxu0 0
  %1640 = vmatmul.mubr.bf16.gmra.mrb[0].mxu0 %v1605
  %v1641 = vpop.f32.mrb[0].mxu0
  %v1642 = vadd.f32 0.0, %v1641
  %v1643 = vpop.f32.mrb[0].mxu0
  %v1644 = vpop.f32.mrb[0].mxu0
  %v1645 = vadd.f32 0.0, %v1644
  %v1646 = vpop.f32.mrb[0].mxu0
  %1647 = vdwg.mxu0
  %v1648 = vadd.f32 %v1372, %v1642
  %v1649 = vadd.f32 %v1373, %v1645
  %v1650 = vadd.f32 %v1648, %v1018
  %v1651 = vadd.f32 %v1649, %v1019
  %s1652 = scalar_lea.vmem %s8, 1
  %v1653 = vld [vmem:[%s1652] sm:$0x1]
  %s1654 = scalar_lea.vmem %s9, 1
  %v1655 = vld [vmem:[%s1654] sm:$0x1]
  %v1656 = vsel %vm70, %v1650, 0.0
  %1657 = vadd.xlane.f32.xlu0 %v1656
  %v1658 = vpop.xlane.xlu0 %1657
  %v1659 = vsel %vm70, %v1651, 0.0
  %1660 = vadd.xlane.f32.xlu0 %v1659
  %v1661 = vpop.xlane.xlu0 %1660
  %v1662 = vmul.f32 %v1658, %v77
  %v1663 = vmul.f32 %v1661, %v77
  %v1664 = vsub.f32 %v1650, %v1662
  %v1665 = vsub.f32 %v1651, %v1663
  %v1666 = vmul.f32 %v1664, %v1664
  %v1667 = vmul.f32 %v1665, %v1665
  %v1668 = vsel %vm70, %v1666, 0.0
  %1669 = vadd.xlane.f32.xlu0 %v1668
  %v1670 = vpop.xlane.xlu0 %1669
  %v1671 = vsel %vm70, %v1667, 0.0
  %1672 = vadd.xlane.f32.xlu0 %v1671
  %v1673 = vpop.xlane.xlu0 %1672
  %v1674 = vmul.f32 %v1670, %v77
  %v1675 = vmul.f32 %v1673, %v77
  %v1676 = vadd.f32 %v1674, 1e-12
  %v1677 = vadd.f32 %v1675, 1e-12
  %v1678 = vrsqrt.pop %v1676
  %v1679 = vrsqrt.pop %v1677
  %v1680 = vmul.f32 %v1664, %v1678
  %v1681 = vmul.f32 %v1665, %v1679
  %v1683 = vlaneseq
  %v1684 = vshrl.u32 %v1683, 7
  %v1685 = vsub.s32 0, %v1684
  %v1686 = vrot.slane %v1653, %v1685
  %v1688 = vmul.f32 %v1680, %v1686
  %v1689 = vmul.f32 %v1681, %v1686
  %v1691 = vlaneseq
  %v1692 = vshrl.u32 %v1691, 7
  %v1693 = vsub.s32 0, %v1692
  %v1694 = vrot.slane %v1655, %v1693
  %v1696 = vadd.f32 %v1688, %v1694
  %v1697 = vadd.f32 %v1689, %v1694
  %v1698 = vpack.c.bf16 %v1697, %v1696
  %s1699 = scalar_lea.vmem %s10, 16
  %v1700 = vld [vmem:[%s1699] sm:$0xf]
  %v1701 = vld [vmem:[%s1699 + $0x4] sm:$0xf]
  %v1702 = vld [vmem:[%s1699 + $0x8] sm:$0xf]
  %v1703 = vld [vmem:[%s1699 + $0xc] sm:$0xf]
  %s1704 = scalar_lea.vmem %s11, 1
  %v1705 = vld [vmem:[%s1704] sm:$0x1]
  %v1707 = vlaneseq
  %v1708 = vshrl.u32 %v1707, 7
  %v1709 = vsub.s32 0, %v1708
  %v1710 = vrot.slane %v1705, %v1709
  %v1716 = vunpack.c.l.b16 %v1700
  %v1717 = vunpack.c.l.b16 %v1701
  %v1718 = vunpack.c.l.b16 %v1702
  %v1719 = vunpack.c.l.b16 %v1703
  %v1720 = vpack.c.b16 %v1717, %v1716
  %v1721 = vpack.c.b16 %v1719, %v1718
  %v1725 = vsel %vm70, %v1698, 0
  %1727 = vmatprep.subr.bf16.mxu0 0
  %1728 = vmatpush1.bf16.msra.mxu0 %v1720
  %1729 = vmatprep.subr.bf16.mxu0 0
  %1730 = vmatpush1.bf16.msra.mxu0 %v1721
  %1731 = vmatprep.subr.bf16.mxu0 0
  %1732 = vmatpush1.bf16.msra.mxu0 0
  %1733 = vmatprep.subr.bf16.mxu0 0
  %1734 = vmatpush1.bf16.msra.mxu0 0
  %1735 = vmatprep.subr.bf16.mxu0 0
  %1736 = vmatpush1.bf16.msra.mxu0 0
  %1737 = vmatprep.subr.bf16.mxu0 0
  %1738 = vmatpush1.bf16.msra.mxu0 0
  %1739 = vmatprep.subr.bf16.mxu0 0
  %1740 = vmatpush1.bf16.msra.mxu0 0
  %1741 = vmatprep.subr.bf16.mxu0 0
  %1742 = vmatpush1.bf16.msra.mxu0 0
  %1743 = vmatprep.subr.bf16.mxu0 0
  %1744 = vmatpush1.bf16.msra.mxu0 0
  %1745 = vmatprep.subr.bf16.mxu0 0
  %1746 = vmatpush1.bf16.msra.mxu0 0
  %1747 = vmatprep.subr.bf16.mxu0 0
  %1748 = vmatpush1.bf16.msra.mxu0 0
  %1749 = vmatprep.subr.bf16.mxu0 0
  %1750 = vmatpush1.bf16.msra.mxu0 0
  %1751 = vmatprep.subr.bf16.mxu0 0
  %1752 = vmatpush1.bf16.msra.mxu0 0
  %1753 = vmatprep.subr.bf16.mxu0 0
  %1754 = vmatpush1.bf16.msra.mxu0 0
  %1755 = vmatprep.subr.bf16.mxu0 0
  %1756 = vmatpush1.bf16.msra.mxu0 0
  %1757 = vmatprep.subr.bf16.mxu0 0
  %1758 = vmatpush1.bf16.msra.mxu0 0
  %1759 = vmatprep.mubr.bf16.mxu0 0
  %1760 = vmatmul.mubr.bf16.gmra.mrb[0].mxu0 %v1725
  %v1761 = vpop.f32.mrb[0].mxu0
  %v1762 = vadd.f32 %v1710, %v1761
  %v1763 = vpop.f32.mrb[0].mxu0
  %v1764 = vpop.f32.mrb[0].mxu0
  %v1765 = vadd.f32 %v1710, %v1764
  %v1766 = vpop.f32.mrb[0].mxu0
  %1767 = vdwg.mxu0
  %v1768 = vmul.f32 %v1762, 0.5
  %v1769 = vmul.f32 %v1765, 0.5
  %v1770 = vmul.f32 %v1762, 0.044715
  %v1771 = vmul.f32 %v1765, 0.044715
  %v1772 = vmul.f32 %v1770, %v1762
  %v1773 = vmul.f32 %v1771, %v1765
  %v1774 = vmul.f32 %v1772, %v1762
  %v1775 = vmul.f32 %v1773, %v1765
  %v1776 = vadd.f32 %v1762, %v1774
  %v1777 = vadd.f32 %v1765, %v1775
  %v1778 = vmul.f32 %v1776, 0.7978846
  %v1779 = vmul.f32 %v1777, 0.7978846
  %v1780 = vtanh.pop %v1778
  %v1781 = vtanh.pop %v1779
  %v1782 = vadd.f32 %v1780, 1.0
  %v1783 = vadd.f32 %v1781, 1.0
  %v1784 = vmul.f32 %v1768, %v1782
  %v1785 = vmul.f32 %v1769, %v1783
  %v1786 = vpack.c.bf16 %v1785, %v1784
  %s1787 = scalar_lea.vmem %s12, 32
  %v1788 = vld [vmem:[%s1787] sm:$0xf]
  %v1789 = vld [vmem:[%s1787 + $0x4] sm:$0xf]
  %v1790 = vld [vmem:[%s1787 + $0x8] sm:$0xf]
  %v1791 = vld [vmem:[%s1787 + $0xc] sm:$0xf]
  %v1792 = vld [vmem:[%s1787 + $0x10] sm:$0xf]
  %v1793 = vld [vmem:[%s1787 + $0x14] sm:$0xf]
  %v1794 = vld [vmem:[%s1787 + $0x18] sm:$0xf]
  %v1795 = vld [vmem:[%s1787 + $0x1c] sm:$0xf]
  %s1796 = scalar_lea.vmem %s13, 1
  %v1797 = vld [vmem:[%s1796] sm:$0x1]
  %v1799 = vlaneseq
  %v1800 = vshrl.u32 %v1799, 7
  %v1801 = vsub.s32 0, %v1800
  %v1802 = vrot.slane %v1797, %v1801
  %v1812 = vunpack.c.l.b16 %v1788
  %v1813 = vunpack.c.l.b16 %v1789
  %v1814 = vunpack.c.l.b16 %v1790
  %v1815 = vunpack.c.l.b16 %v1791
  %v1816 = vunpack.c.l.b16 %v1792
  %v1817 = vunpack.c.l.b16 %v1793
  %v1818 = vunpack.c.l.b16 %v1794
  %v1819 = vunpack.c.l.b16 %v1795
  %v1820 = vpack.c.b16 %v1813, %v1812
  %v1821 = vpack.c.b16 %v1815, %v1814
  %v1822 = vpack.c.b16 %v1817, %v1816
  %v1823 = vpack.c.b16 %v1819, %v1818
  %v1829 = vsel %vm929, %v1786, 0
  %1831 = vmatprep.subr.bf16.mxu0 0
  %1832 = vmatpush1.bf16.msra.mxu0 %v1820
  %1833 = vmatprep.subr.bf16.mxu0 0
  %1834 = vmatpush1.bf16.msra.mxu0 %v1821
  %1835 = vmatprep.subr.bf16.mxu0 0
  %1836 = vmatpush1.bf16.msra.mxu0 %v1822
  %1837 = vmatprep.subr.bf16.mxu0 0
  %1838 = vmatpush1.bf16.msra.mxu0 %v1823
  %1839 = vmatprep.subr.bf16.mxu0 0
  %1840 = vmatpush1.bf16.msra.mxu0 0
  %1841 = vmatprep.subr.bf16.mxu0 0
  %1842 = vmatpush1.bf16.msra.mxu0 0
  %1843 = vmatprep.subr.bf16.mxu0 0
  %1844 = vmatpush1.bf16.msra.mxu0 0
  %1845 = vmatprep.subr.bf16.mxu0 0
  %1846 = vmatpush1.bf16.msra.mxu0 0
  %1847 = vmatprep.subr.bf16.mxu0 0
  %1848 = vmatpush1.bf16.msra.mxu0 0
  %1849 = vmatprep.subr.bf16.mxu0 0
  %1850 = vmatpush1.bf16.msra.mxu0 0
  %1851 = vmatprep.subr.bf16.mxu0 0
  %1852 = vmatpush1.bf16.msra.mxu0 0
  %1853 = vmatprep.subr.bf16.mxu0 0
  %1854 = vmatpush1.bf16.msra.mxu0 0
  %1855 = vmatprep.subr.bf16.mxu0 0
  %1856 = vmatpush1.bf16.msra.mxu0 0
  %1857 = vmatprep.subr.bf16.mxu0 0
  %1858 = vmatpush1.bf16.msra.mxu0 0
  %1859 = vmatprep.subr.bf16.mxu0 0
  %1860 = vmatpush1.bf16.msra.mxu0 0
  %1861 = vmatprep.subr.bf16.mxu0 0
  %1862 = vmatpush1.bf16.msra.mxu0 0
  %1863 = vmatprep.mubr.bf16.mxu0 0
  %1864 = vmatmul.mubr.bf16.gmra.mrb[0].mxu0 %v1829
  %v1865 = vpop.f32.mrb[0].mxu0
  %v1866 = vadd.f32 %v1802, %v1865
  %v1867 = vpop.f32.mrb[0].mxu0
  %v1868 = vpop.f32.mrb[0].mxu0
  %v1869 = vadd.f32 %v1802, %v1868
  %v1870 = vpop.f32.mrb[0].mxu0
  %1871 = vdwg.mxu0
  %v1872 = vadd.f32 %v1866, %v1696
  %v1873 = vadd.f32 %v1869, %v1697
  %s1874 = scalar_lea.vmem %s14, 1
  %v1875 = vld [vmem:[%s1874] sm:$0x1]
  %s1876 = scalar_lea.vmem %s15, 1
  %v1877 = vld [vmem:[%s1876] sm:$0x1]
  %v1878 = vsel %vm70, %v1872, 0.0
  %1879 = vadd.xlane.f32.xlu0 %v1878
  %v1880 = vpop.xlane.xlu0 %1879
  %v1881 = vsel %vm70, %v1873, 0.0
  %1882 = vadd.xlane.f32.xlu0 %v1881
  %v1883 = vpop.xlane.xlu0 %1882
  %v1884 = vmul.f32 %v1880, %v77
  %v1885 = vmul.f32 %v1883, %v77
  %v1886 = vsub.f32 %v1872, %v1884
  %v1887 = vsub.f32 %v1873, %v1885
  %v1888 = vmul.f32 %v1886, %v1886
  %v1889 = vmul.f32 %v1887, %v1887
  %v1890 = vsel %vm70, %v1888, 0.0
  %1891 = vadd.xlane.f32.xlu0 %v1890
  %v1892 = vpop.xlane.xlu0 %1891
  %v1893 = vsel %vm70, %v1889, 0.0
  %1894 = vadd.xlane.f32.xlu0 %v1893
  %v1895 = vpop.xlane.xlu0 %1894
  %v1896 = vmul.f32 %v1892, %v77
  %v1897 = vmul.f32 %v1895, %v77
  %v1898 = vadd.f32 %v1896, 1e-12
  %v1899 = vadd.f32 %v1897, 1e-12
  %v1900 = vrsqrt.pop %v1898
  %v1901 = vrsqrt.pop %v1899
  %v1902 = vmul.f32 %v1886, %v1900
  %v1903 = vmul.f32 %v1887, %v1901
  %v1905 = vlaneseq
  %v1906 = vshrl.u32 %v1905, 7
  %v1907 = vsub.s32 0, %v1906
  %v1908 = vrot.slane %v1875, %v1907
  %v1910 = vmul.f32 %v1902, %v1908
  %v1911 = vmul.f32 %v1903, %v1908
  %v1913 = vlaneseq
  %v1914 = vshrl.u32 %v1913, 7
  %v1915 = vsub.s32 0, %v1914
  %v1916 = vrot.slane %v1877, %v1915
  %v1918 = vadd.f32 %v1910, %v1916
  %v1919 = vadd.f32 %v1911, %v1916
  %v1920 = vpack.c.bf16 %v1918, %v1918
  %v1921 = vpack.c.bf16 %v1919, %v1919
  %v1922 = vld [vmem:[%s16] sm:$0xf]
  %v1923 = vld [vmem:[%s16 + $0x4] sm:$0xf]
  %v1924 = vld [vmem:[%s16 + $0x8] sm:$0xf]
  %v1925 = vld [vmem:[%s16 + $0xc] sm:$0xf]
  %v1926 = vld [vmem:[%s17] sm:$0x1]
  %v1928 = vlaneseq
  %v1929 = vshrl.u32 %v1928, 7
  %v1930 = vsub.s32 0, %v1929
  %v1931 = vrot.slane %v1926, %v1930
  %v1935 = vunpack.c.l.b16 %v1920
  %v1936 = vunpack.c.l.b16 %v1921
  %v1937 = vrot.slane %v1936, 7
  %vm1938 = vcmask 1041409
  %v1939 = vsel %vm1938, %v1937, %v1935
  %v1940 = vpack.c.b16 %v1939, %v1939
  %v1945 = vunpack.c.l.b16 %v1922
  %v1946 = vunpack.c.l.b16 %v1923
  %v1947 = vunpack.c.l.b16 %v1924
  %v1948 = vunpack.c.l.b16 %v1925
  %v1949 = vpack.c.b16 %v1946, %v1945
  %v1950 = vpack.c.b16 %v1948, %v1947
  %v1954 = vsel %vm70, %v1940, 0
  %1956 = vmatprep.subr.bf16.mxu0 0
  %1957 = vmatpush1.bf16.msra.mxu0 %v1949
  %1958 = vmatprep.subr.bf16.mxu0 0
  %1959 = vmatpush1.bf16.msra.mxu0 %v1950
  %1960 = vmatprep.subr.bf16.mxu0 0
  %1961 = vmatpush1.bf16.msra.mxu0 0
  %1962 = vmatprep.subr.bf16.mxu0 0
  %1963 = vmatpush1.bf16.msra.mxu0 0
  %1964 = vmatprep.subr.bf16.mxu0 0
  %1965 = vmatpush1.bf16.msra.mxu0 0
  %1966 = vmatprep.subr.bf16.mxu0 0
  %1967 = vmatpush1.bf16.msra.mxu0 0
  %1968 = vmatprep.subr.bf16.mxu0 0
  %1969 = vmatpush1.bf16.msra.mxu0 0
  %1970 = vmatprep.subr.bf16.mxu0 0
  %1971 = vmatpush1.bf16.msra.mxu0 0
  %1972 = vmatprep.subr.bf16.mxu0 0
  %1973 = vmatpush1.bf16.msra.mxu0 0
  %1974 = vmatprep.subr.bf16.mxu0 0
  %1975 = vmatpush1.bf16.msra.mxu0 0
  %1976 = vmatprep.subr.bf16.mxu0 0
  %1977 = vmatpush1.bf16.msra.mxu0 0
  %1978 = vmatprep.subr.bf16.mxu0 0
  %1979 = vmatpush1.bf16.msra.mxu0 0
  %1980 = vmatprep.subr.bf16.mxu0 0
  %1981 = vmatpush1.bf16.msra.mxu0 0
  %1982 = vmatprep.subr.bf16.mxu0 0
  %1983 = vmatpush1.bf16.msra.mxu0 0
  %1984 = vmatprep.subr.bf16.mxu0 0
  %1985 = vmatpush1.bf16.msra.mxu0 0
  %1986 = vmatprep.subr.bf16.mxu0 0
  %1987 = vmatpush1.bf16.msra.mxu0 0
  %1988 = vmatprep.mubr.bf16.mxu0 0
  %1989 = vmatmul.mubr.bf16.gmra.mrb[0].mxu0 %v1954
  %v1990 = vpop.f32.mrb[0].mxu0
  %v1991 = vadd.f32 %v1931, %v1990
  %v1992 = vpop.f32.mrb[0].mxu0
  %v1993 = vpop.f32.mrb[0].mxu0
  %v1994 = vpop.f32.mrb[0].mxu0
  %1995 = vdwg.mxu0
  %v1996 = vtanh.pop %v1991
  %v1997 = vpack.c.bf16 %v1996, %v1996
  %v1998 = vld [vmem:[%s18] sm:$0xf]
  %v1999 = vld [vmem:[%s18 + $0x4] sm:$0xf]
  %v2000 = vld [vmem:[%s18 + $0x8] sm:$0xf]
  %v2001 = vld [vmem:[%s18 + $0xc] sm:$0xf]
  %v2002 = vld [vmem:[%s19] sm:$0x1]
  %v2004 = vlaneseq
  %v2005 = vshrl.u32 %v2004, 7
  %v2006 = vsub.s32 0, %v2005
  %v2007 = vrot.slane %v2002, %v2006
  %v2013 = vunpack.c.l.b16 %v1998
  %v2014 = vunpack.c.l.b16 %v1999
  %v2015 = vunpack.c.l.b16 %v2000
  %v2016 = vunpack.c.l.b16 %v2001
  %v2017 = vpack.c.b16 %v2014, %v2013
  %v2018 = vpack.c.b16 %v2016, %v2015
  %v2022 = vsel %vm70, %v1997, 0
  %2024 = vmatprep.subr.bf16.mxu0 0
  %2025 = vmatpush1.bf16.msra.mxu0 %v2017
  %2026 = vmatprep.subr.bf16.mxu0 0
  %2027 = vmatpush1.bf16.msra.mxu0 %v2018
  %2028 = vmatprep.subr.bf16.mxu0 0
  %2029 = vmatpush1.bf16.msra.mxu0 0
  %2030 = vmatprep.subr.bf16.mxu0 0
  %2031 = vmatpush1.bf16.msra.mxu0 0
  %2032 = vmatprep.subr.bf16.mxu0 0
  %2033 = vmatpush1.bf16.msra.mxu0 0
  %2034 = vmatprep.subr.bf16.mxu0 0
  %2035 = vmatpush1.bf16.msra.mxu0 0
  %2036 = vmatprep.subr.bf16.mxu0 0
  %2037 = vmatpush1.bf16.msra.mxu0 0
  %2038 = vmatprep.subr.bf16.mxu0 0
  %2039 = vmatpush1.bf16.msra.mxu0 0
  %2040 = vmatprep.subr.bf16.mxu0 0
  %2041 = vmatpush1.bf16.msra.mxu0 0
  %2042 = vmatprep.subr.bf16.mxu0 0
  %2043 = vmatpush1.bf16.msra.mxu0 0
  %2044 = vmatprep.subr.bf16.mxu0 0
  %2045 = vmatpush1.bf16.msra.mxu0 0
  %2046 = vmatprep.subr.bf16.mxu0 0
  %2047 = vmatpush1.bf16.msra.mxu0 0
  %2048 = vmatprep.subr.bf16.mxu0 0
  %2049 = vmatpush1.bf16.msra.mxu0 0
  %2050 = vmatprep.subr.bf16.mxu0 0
  %2051 = vmatpush1.bf16.msra.mxu0 0
  %2052 = vmatprep.subr.bf16.mxu0 0
  %2053 = vmatpush1.bf16.msra.mxu0 0
  %2054 = vmatprep.subr.bf16.mxu0 0
  %2055 = vmatpush1.bf16.msra.mxu0 0
  %2056 = vmatprep.mubr.bf16.mxu0 0
  %2057 = vmatmul.mubr.bf16.gmra.mrb[0].mxu0 %v2022
  %v2058 = vpop.f32.mrb[0].mxu0
  %v2059 = vadd.f32 %v2007, %v2058
  %v2060 = vpop.f32.mrb[0].mxu0
  %v2061 = vpop.f32.mrb[0].mxu0
  %v2062 = vpop.f32.mrb[0].mxu0
  %2063 = vdwg.mxu0
  %vm2064 = vcmask 1041408
  %v2065 = vsel %vm2064, %v2059, -inf
  %2066 = vmax.xlane.f32.xlu0 %v2065
  %v2067 = vpop.xlane.xlu0 %2066
  %v2068 = vsub.f32 %v2059, %v2067
  %v2069 = vmul.f32 %v2068, 1.442695
  %v2070 = vpow.pop %v2069
  %v2071 = vsel %vm2064, %v2070, 0.0
  %2072 = vadd.xlane.f32.xlu0 %v2071
  %v2073 = vpop.xlane.xlu0 %2072
  %v2074 = vrcp.pop %v2073
  %v2075 = vmul.f32 %v2070, %v2074
  %2076 = vst [vmem:[%s20] sm:$0x3] %v2059
  %s2077 = scalar_lea.vmem %s20, 2
  %2078 = vst [vmem:[%s2077] sm:$0x3] %v2075
  // Predicated region
  $region82: #{bert_fc_forward.1} parent=0 // pred_check
    _
  $region83: #{bert_fc_forward.1} parent=0 // pred_check_branch
    %2080 = sbr.rel (0) target = $region85
  $region84: #{bert_fc_forward.1} parent=0 // pred_region
    _
  $region85: #{bert_fc_forward.1} parent=0 // pred_fallthru
    _
  // Predicated region
  $region86: #{bert_fc_forward.1} parent=0 // pred_check
    _
  $region87: #{bert_fc_forward.1} parent=0 // pred_check_branch
    %2082 = sbr.rel (0) target = $region89
  $region88: #{bert_fc_forward.1} parent=0 // pred_region
    _
  $region89: #{bert_fc_forward.1} parent=0 // pred_fallthru
    _

</llo_original>
